<compile_context>
chip_gen: v6e
topology: v6e:2x2x1
jax: 0.10.0
libtpu: 0.0.40
codegen_flags: <defaults>
</compile_context>

<pallas_src>
import numpy as np
import jax
import jax.numpy as jnp
from jax import lax
from jax.experimental import pallas as pl
from jax.experimental.pallas import tpu as pltpu


_VMEM = pltpu.MemorySpace.VMEM
_SMEM = pltpu.MemorySpace.SMEM


# ------------------------------ fused kernel -------------------------------- #

def encoder_kernel(ids_ref, z_ref, table_ref,
                   wih1_ref, whh1_ref, b1_ref,
                   wih2_ref, whh2_ref, b2_ref,
                   wih3_ref, whh3_ref, b3_ref,
                   wh_ref, bh_ref,
                   mu_ref, logvar_ref):
    # ids_ref:   (B*T,) int32 in SMEM, batch-major flat token ids (n = b*T + t)
    # z_ref:     (B, Z) f32 VMEM
    # table_ref: (V, E) f32 VMEM (tiny -> fully resident, gathered in-VMEM)
    # wih*_ref:  (2*D_prev, 8H) bf16; cols = [fwd i|f|g|o (4H) | bwd i|f|g|o (4H)]
    # whh*_ref:  (2H, 8H) bf16 block-diagonal so [h_f | h_b] @ whh gives both dirs
    # b*_ref:    (1, 8H) f32 (b_ih + b_hh, fwd half | bwd half)
    # wh_ref:    (F, 2*Zd) bf16 pre-folded head (w1 @ w2); bh_ref: (1, 2*Zd) f32
    # mu_ref / logvar_ref: (B, Zd) f32 outputs
    V, E = table_ref.shape
    B, Z = z_ref.shape
    N = ids_ref.shape[0]
    T = N // B
    H = whh1_ref.shape[0] // 2
    D0 = E + Z

    # ---- embedding gather + z concat (all in VMEM, no DMA descriptors) ------
    # Rows are gathered in time-major order directly via static SMEM addressing.
    rows = [table_ref[pl.ds(ids_ref[b * T + t], 1), :]          # (1, E)
            for t in range(T) for b in range(B)]
    emb = jnp.concatenate(rows, axis=0).reshape(T, B, E)        # (T, B, E)
    zb = jnp.broadcast_to(z_ref[...].reshape(1, B, Z), (T, B, Z))
    x = jnp.concatenate([emb, zb], axis=-1)                     # (T, B, E+Z)
    # pair-merge for pyramid layer 1: (T/2, B, 2*(E+Z))
    xr = x.reshape(T // 2, 2, B, D0)
    x = jnp.concatenate([xr[:, 0], xr[:, 1]], axis=-1)

    def lstm_cell(g4, c):
        # g4: (B, 4H) gates [i | f | g | o] of one direction; c: (B, H)
        i = jax.nn.sigmoid(g4[:, 0:H])
        f = jax.nn.sigmoid(g4[:, H:2 * H])
        g = jnp.tanh(g4[:, 2 * H:3 * H])
        o = jax.nn.sigmoid(g4[:, 3 * H:4 * H])
        c_new = f * c + i * g
        return o * jnp.tanh(c_new), c_new

    def bilstm(x_merged, wih_r, whh_r, bias_r):
        # x_merged: (Tm, B, K) pair-merged input -> per-step fwd/bwd hiddens.
        Tm, Bm, K = x_merged.shape
        G = 8 * H
        wih = wih_r[...]
        whh = whh_r[...]
        bias = bias_r[...]
        # Hoisted input projection: both directions, all merged steps, one matmul.
        proj = (jnp.dot(x_merged.reshape(Tm * Bm, K).astype(jnp.bfloat16), wih,
                        preferred_element_type=jnp.float32)
                + bias).reshape(Tm, Bm, G)

        h_f = jnp.zeros((Bm, H), jnp.float32)
        h_b = jnp.zeros((Bm, H), jnp.float32)
        c_f = jnp.zeros((Bm, H), jnp.float32)
        c_b = jnp.zeros((Bm, H), jnp.float32)
        hf = [None] * Tm
        hb = [None] * Tm
        # Fully unrolled: Tm <= 4 here.
        # TODO(synk): use lax.fori_loop(..., unroll=k) for non-toy T.
        for k in range(Tm):
            # fwd consumes merged step k, bwd consumes merged step Tm-1-k;
            # contiguous gate halves -> two slice reads + one concat (no where).
            g_step = jnp.concatenate(
                [proj[k, :, :4 * H], proj[Tm - 1 - k, :, 4 * H:]], axis=-1)
            h_cat = jnp.concatenate([h_f, h_b], axis=-1).astype(jnp.bfloat16)
            gates = g_step + jnp.dot(h_cat, whh,
                                     preferred_element_type=jnp.float32)
            h_f, c_f = lstm_cell(gates[:, :4 * H], c_f)
            h_b, c_b = lstm_cell(gates[:, 4 * H:], c_b)
            hf[k] = h_f
            hb[Tm - 1 - k] = h_b
        return hf, hb

    def merge_pairs(hf, hb):
        # per-step (B,H) fwd/bwd hiddens -> pair-merged next-layer input
        # (Tm//2, B, 4H); feature order per merged step: [h_f(2k) h_b(2k) h_f(2k+1) h_b(2k+1)]
        steps = []
        for k in range(len(hf) // 2):
            steps.append(jnp.concatenate(
                [hf[2 * k], hb[2 * k], hf[2 * k + 1], hb[2 * k + 1]],
                axis=-1)[None])
        return jnp.concatenate(steps, axis=0)

    hf, hb = bilstm(x, wih1_ref, whh1_ref, b1_ref)
    x = merge_pairs(hf, hb)
    hf, hb = bilstm(x, wih2_ref, whh2_ref, b2_ref)
    x = merge_pairs(hf, hb)
    hf, hb = bilstm(x, wih3_ref, whh3_ref, b3_ref)

    # ---- head epilogue (flatten order matches PyTorch: [t0(fwd,bwd), t1(...), ...])
    parts = []
    for t in range(len(hf)):
        parts.append(hf[t])
        parts.append(hb[t])
    flat = jnp.concatenate(parts, axis=-1)                       # (B, Tf*2H)
    out = (jnp.dot(flat.astype(jnp.bfloat16), wh_ref[...],
                   preferred_element_type=jnp.float32) + bh_ref[...])
    Zd = mu_ref.shape[1]
    mu_ref[...] = out[:, :Zd]
    logvar_ref[...] = out[:, Zd:]


# --------------------------------- wrapper ----------------------------------- #

def encoder_forward(kparams, input_seq, z):
    B, T = input_seq.shape
    assert T % 8 == 0, "3 pyramid layers (factor 2 each) need T % 8 == 0"
    z_dim = kparams["b_head"].shape[1] // 2
    ids = input_seq.reshape(B * T).astype(jnp.int32)     # batch-major flat ids

    args = [ids, z, kparams["embedding"]]
    for lp in kparams["lstm_layers"]:
        args += [lp["wih"], lp["whh"], lp["b"]]
    args += [kparams["w_head"], kparams["b_head"]]

    in_specs = ([pl.BlockSpec(memory_space=_SMEM)]
                + [pl.BlockSpec(memory_space=_VMEM)] * (len(args) - 1))

    mu, logvar = pl.pallas_call(
        encoder_kernel,
        out_shape=(jax.ShapeDtypeStruct((B, z_dim), jnp.float32),
                   jax.ShapeDtypeStruct((B, z_dim), jnp.float32)),
        in_specs=in_specs,
        out_specs=(pl.BlockSpec(memory_space=_VMEM),
                   pl.BlockSpec(memory_space=_VMEM)),
    )(*args)
    return mu, logvar


# --------------------- kernel-side parameter preparation -------------------- #

def prepare_kernel_params(params):
    H = params["lstm_layers"][0]["whh_f"].shape[0]
    kp = {"embedding": params["embedding"]}
    layers = []
    zblk = jnp.zeros((H, 4 * H), jnp.float32)
    for lp in params["lstm_layers"]:
        # contiguous gate halves: [fwd i f g o | bwd i f g o]
        wih = jnp.concatenate([lp["wih_f"], lp["wih_b"]], axis=-1)        # (2D, 8H)
        whh = jnp.concatenate(
            [jnp.concatenate([lp["whh_f"], zblk], axis=-1),               # h_f rows
             jnp.concatenate([zblk, lp["whh_b"]], axis=-1)], axis=0)      # h_b rows
        b = jnp.concatenate([lp["b_f"], lp["b_b"]], axis=-1)              # (1, 8H)
        layers.append(dict(wih=wih.astype(jnp.bfloat16),
                           whh=whh.astype(jnp.bfloat16),
                           b=b.astype(jnp.float32)))
    kp["lstm_layers"] = layers
    # Fold the two activation-free head Linears into one matmul.
    w_head = params["w1"] @ params["w2"]                                  # (F, 2Z)
    b_head = params["b1"] @ params["w2"] + params["b2"]                   # (1, 2Z)
    kp["w_head"] = w_head.astype(jnp.bfloat16)
    kp["b_head"] = b_head.astype(jnp.float32)
    return kp


# ------------------------- pure-JAX reference ------------------------------ #

def ref_bilstm(x, p):
    B, T, _ = x.shape
    H = p["whh_f"].shape[0]

    def run(wih, whh, b, reverse):
        def step(carry, x_t):
            h, c = carry
            gates = x_t @ wih + h @ whh + b
            i = jax.nn.sigmoid(gates[:, :H])
            f = jax.nn.sigmoid(gates[:, H:2 * H])
            g = jnp.tanh(gates[:, 2 * H:3 * H])
            o = jax.nn.sigmoid(gates[:, 3 * H:])
            c = f * c + i * g
            h = o * jnp.tanh(c)
            return (h, c), h
        xs = jnp.transpose(x, (1, 0, 2))
        if reverse:
            xs = xs[::-1]
        _, hs = lax.scan(step, (jnp.zeros((B, H)), jnp.zeros((B, H))), xs)
        if reverse:
            hs = hs[::-1]
        return jnp.transpose(hs, (1, 0, 2))

    out_f = run(p["wih_f"], p["whh_f"], p["b_f"], False)
    out_b = run(p["wih_b"], p["whh_b"], p["b_b"], True)
    return jnp.concatenate([out_f, out_b], axis=-1)


def ref_forward(params, input_seq, z):
    emb = jnp.take(params["embedding"], input_seq, axis=0)
    B, T, _ = emb.shape
    z_expand = jnp.broadcast_to(z[:, None, :], (B, T, z.shape[-1]))
    x = jnp.concatenate([emb, z_expand], axis=-1)
    for lp in params["lstm_layers"]:
        b_, t_, d_ = x.shape
        x = x.reshape(b_, t_ // 2, d_ * 2)
        x = ref_bilstm(x, lp)
    flat = x.reshape(B, -1)
    h = flat @ params["w1"] + params["b1"]
    out = h @ params["w2"] + params["b2"]
    return jnp.split(out, 2, axis=-1)


# ------------------------------ init --------------------------------------- #

def init_lstm_params(key, input_dim, hidden):
    bound = 1.0 / np.sqrt(hidden)
    ks = jax.random.split(key, 8)

    def u(k, shape):
        return jax.random.uniform(k, shape, jnp.float32, -bound, bound)

    wih_f = u(ks[0], (4 * hidden, input_dim))
    whh_f = u(ks[1], (4 * hidden, hidden))
    b_f = u(ks[2], (4 * hidden,)) + u(ks[3], (4 * hidden,))   # b_ih + b_hh
    wih_b = u(ks[4], (4 * hidden, input_dim))
    whh_b = u(ks[5], (4 * hidden, hidden))
    b_b = u(ks[6], (4 * hidden,)) + u(ks[7], (4 * hidden,))
    return dict(
        wih_f=wih_f.T, whh_f=whh_f.T, b_f=b_f.reshape(1, -1),
        wih_b=wih_b.T, whh_b=whh_b.T, b_b=b_b.reshape(1, -1),
    )


def init_params(key, vocab_size, embed_size, time_step, hidden_size, z_dim,
                pad_idx):
    ks = jax.random.split(key, 8)
    emb = jax.random.normal(ks[0], (vocab_size, embed_size), jnp.float32)
    emb = emb.at[pad_idx].set(0.0)   # padding_idx row -> zeros

    lstm_input_dims = [(embed_size + z_dim) * 2,
                       (2 * hidden_size) * 2,
                       (2 * hidden_size) * 2]
    lstm_layers = [init_lstm_params(ks[1 + i], d, hidden_size)
                   for i, d in enumerate(lstm_input_dims)]

    in_feat = hidden_size * 2 * time_step // 8
    k1 = 1.0 / np.sqrt(in_feat)
    k2 = 1.0 / np.sqrt(hidden_size * 2)
    w1 = jax.random.uniform(ks[4], (2 * hidden_size, in_feat), jnp.float32,
                            -k1, k1).T
    b1 = jax.random.uniform(ks[5], (1, 2 * hidden_size), jnp.float32, -k1, k1)
    w2 = jax.random.uniform(ks[6], (2 * z_dim, 2 * hidden_size), jnp.float32,
                            -k2, k2).T
    b2 = jax.random.uniform(ks[7], (1, 2 * z_dim), jnp.float32, -k2, k2)

    return dict(embedding=emb, lstm_layers=lstm_layers,
                w1=w1, b1=b1, w2=w2, b2=b2)


# ------------------------------- main --------------------------------------- #

if __name__ == "__main__":
    vocab_size, embed_size, time_step = 50, 16, 8
    hidden_size, z_dim, pad_idx = 32, 8, 0
    batch = 2

    root = jax.random.PRNGKey(0)
    k_param, k_idx, k_z = jax.random.split(root, 3)

    params = init_params(k_param, vocab_size, embed_size, time_step,
                         hidden_size, z_dim, pad_idx)
    kparams = prepare_kernel_params(params)

    input_seq = jax.random.randint(k_idx, (batch, time_step), 0, vocab_size,
                                   dtype=jnp.int32)
    z = jax.random.normal(k_z, (batch, z_dim), jnp.float32)

    mu, logvar = jax.jit(encoder_forward)(kparams, input_seq, z)
    jax.block_until_ready((mu, logvar))

    mu_ref, logvar_ref = ref_forward(params, input_seq, z)
    np.testing.assert_allclose(np.asarray(mu), np.asarray(mu_ref),
                               rtol=2e-2, atol=2e-2)
    np.testing.assert_allclose(np.asarray(logvar), np.asarray(logvar_ref),
                               rtol=2e-2, atol=2e-2)

    assert mu.shape == (batch, z_dim) and logvar.shape == (batch, z_dim)
    print("KERNEL_OK")
</pallas_src>

<mosaic_0001>
module attributes {stable_mosaic.version = 11 : i64} {
  func.func @encoder_kernel(%arg0: memref<16xi32, #tpu.memory_space<smem>>, %arg1: memref<2x8xf32, #tpu.memory_space<vmem>>, %arg2: memref<50x16xf32, #tpu.memory_space<vmem>>, %arg3: memref<48x256xbf16, #tpu.memory_space<vmem>>, %arg4: memref<64x256xbf16, #tpu.memory_space<vmem>>, %arg5: memref<1x256xf32, #tpu.memory_space<vmem>>, %arg6: memref<128x256xbf16, #tpu.memory_space<vmem>>, %arg7: memref<64x256xbf16, #tpu.memory_space<vmem>>, %arg8: memref<1x256xf32, #tpu.memory_space<vmem>>, %arg9: memref<128x256xbf16, #tpu.memory_space<vmem>>, %arg10: memref<64x256xbf16, #tpu.memory_space<vmem>>, %arg11: memref<1x256xf32, #tpu.memory_space<vmem>>, %arg12: memref<64x16xbf16, #tpu.memory_space<vmem>>, %arg13: memref<1x16xf32, #tpu.memory_space<vmem>>, %arg14: memref<2x8xf32, #tpu.memory_space<vmem>>, %arg15: memref<2x8xf32, #tpu.memory_space<vmem>>) attributes {dimension_semantics = [], scalar_prefetch = 0 : i64, scratch_operands = 0 : i64, tpu.core_type = #tpu.core_type<tc>} {
    %c0 = arith.constant 0 : index
    %0 = memref.load %arg0[%c0] : memref<16xi32, #tpu.memory_space<smem>>
    %1 = arith.index_cast %0 : i32 to index
    %c0_0 = arith.constant 0 : index
    %2 = vector.load %arg2[%1, %c0_0] : memref<50x16xf32, #tpu.memory_space<vmem>>, vector<1x16xf32>
    %c8 = arith.constant 8 : index
    %3 = memref.load %arg0[%c8] : memref<16xi32, #tpu.memory_space<smem>>
    %4 = arith.index_cast %3 : i32 to index
    %c0_1 = arith.constant 0 : index
    %5 = vector.load %arg2[%4, %c0_1] : memref<50x16xf32, #tpu.memory_space<vmem>>, vector<1x16xf32>
    %c1 = arith.constant 1 : index
    %6 = memref.load %arg0[%c1] : memref<16xi32, #tpu.memory_space<smem>>
    %7 = arith.index_cast %6 : i32 to index
    %c0_2 = arith.constant 0 : index
    %8 = vector.load %arg2[%7, %c0_2] : memref<50x16xf32, #tpu.memory_space<vmem>>, vector<1x16xf32>
    %c9 = arith.constant 9 : index
    %9 = memref.load %arg0[%c9] : memref<16xi32, #tpu.memory_space<smem>>
    %10 = arith.index_cast %9 : i32 to index
    %c0_3 = arith.constant 0 : index
    %11 = vector.load %arg2[%10, %c0_3] : memref<50x16xf32, #tpu.memory_space<vmem>>, vector<1x16xf32>
    %c2 = arith.constant 2 : index
    %12 = memref.load %arg0[%c2] : memref<16xi32, #tpu.memory_space<smem>>
    %13 = arith.index_cast %12 : i32 to index
    %c0_4 = arith.constant 0 : index
    %14 = vector.load %arg2[%13, %c0_4] : memref<50x16xf32, #tpu.memory_space<vmem>>, vector<1x16xf32>
    %c10 = arith.constant 10 : index
    %15 = memref.load %arg0[%c10] : memref<16xi32, #tpu.memory_space<smem>>
    %16 = arith.index_cast %15 : i32 to index
    %c0_5 = arith.constant 0 : index
    %17 = vector.load %arg2[%16, %c0_5] : memref<50x16xf32, #tpu.memory_space<vmem>>, vector<1x16xf32>
    %c3 = arith.constant 3 : index
    %18 = memref.load %arg0[%c3] : memref<16xi32, #tpu.memory_space<smem>>
    %19 = arith.index_cast %18 : i32 to index
    %c0_6 = arith.constant 0 : index
    %20 = vector.load %arg2[%19, %c0_6] : memref<50x16xf32, #tpu.memory_space<vmem>>, vector<1x16xf32>
    %c11 = arith.constant 11 : index
    %21 = memref.load %arg0[%c11] : memref<16xi32, #tpu.memory_space<smem>>
    %22 = arith.index_cast %21 : i32 to index
    %c0_7 = arith.constant 0 : index
    %23 = vector.load %arg2[%22, %c0_7] : memref<50x16xf32, #tpu.memory_space<vmem>>, vector<1x16xf32>
    %c4 = arith.constant 4 : index
    %24 = memref.load %arg0[%c4] : memref<16xi32, #tpu.memory_space<smem>>
    %25 = arith.index_cast %24 : i32 to index
    %c0_8 = arith.constant 0 : index
    %26 = vector.load %arg2[%25, %c0_8] : memref<50x16xf32, #tpu.memory_space<vmem>>, vector<1x16xf32>
    %c12 = arith.constant 12 : index
    %27 = memref.load %arg0[%c12] : memref<16xi32, #tpu.memory_space<smem>>
    %28 = arith.index_cast %27 : i32 to index
    %c0_9 = arith.constant 0 : index
    %29 = vector.load %arg2[%28, %c0_9] : memref<50x16xf32, #tpu.memory_space<vmem>>, vector<1x16xf32>
    %c5 = arith.constant 5 : index
    %30 = memref.load %arg0[%c5] : memref<16xi32, #tpu.memory_space<smem>>
    %31 = arith.index_cast %30 : i32 to index
    %c0_10 = arith.constant 0 : index
    %32 = vector.load %arg2[%31, %c0_10] : memref<50x16xf32, #tpu.memory_space<vmem>>, vector<1x16xf32>
    %c13 = arith.constant 13 : index
    %33 = memref.load %arg0[%c13] : memref<16xi32, #tpu.memory_space<smem>>
    %34 = arith.index_cast %33 : i32 to index
    %c0_11 = arith.constant 0 : index
    %35 = vector.load %arg2[%34, %c0_11] : memref<50x16xf32, #tpu.memory_space<vmem>>, vector<1x16xf32>
    %c6 = arith.constant 6 : index
    %36 = memref.load %arg0[%c6] : memref<16xi32, #tpu.memory_space<smem>>
    %37 = arith.index_cast %36 : i32 to index
    %c0_12 = arith.constant 0 : index
    %38 = vector.load %arg2[%37, %c0_12] : memref<50x16xf32, #tpu.memory_space<vmem>>, vector<1x16xf32>
    %c14 = arith.constant 14 : index
    %39 = memref.load %arg0[%c14] : memref<16xi32, #tpu.memory_space<smem>>
    %40 = arith.index_cast %39 : i32 to index
    %c0_13 = arith.constant 0 : index
    %41 = vector.load %arg2[%40, %c0_13] : memref<50x16xf32, #tpu.memory_space<vmem>>, vector<1x16xf32>
    %c7 = arith.constant 7 : index
    %42 = memref.load %arg0[%c7] : memref<16xi32, #tpu.memory_space<smem>>
    %43 = arith.index_cast %42 : i32 to index
    %c0_14 = arith.constant 0 : index
    %44 = vector.load %arg2[%43, %c0_14] : memref<50x16xf32, #tpu.memory_space<vmem>>, vector<1x16xf32>
    %c15 = arith.constant 15 : index
    %45 = memref.load %arg0[%c15] : memref<16xi32, #tpu.memory_space<smem>>
    %46 = arith.index_cast %45 : i32 to index
    %c0_15 = arith.constant 0 : index
    %47 = vector.load %arg2[%46, %c0_15] : memref<50x16xf32, #tpu.memory_space<vmem>>, vector<1x16xf32>
    %48 = tpu.concatenate %2, %5, %8, %11, %14, %17, %20, %23, %26, %29, %32, %35, %38, %41, %44, %47 in 0 : vector<1x16xf32>, vector<1x16xf32>, vector<1x16xf32>, vector<1x16xf32>, vector<1x16xf32>, vector<1x16xf32>, vector<1x16xf32>, vector<1x16xf32>, vector<1x16xf32>, vector<1x16xf32>, vector<1x16xf32>, vector<1x16xf32>, vector<1x16xf32>, vector<1x16xf32>, vector<1x16xf32>, vector<1x16xf32> -> vector<16x16xf32>
    %49 = vector.shape_cast %48 : vector<16x16xf32> to vector<8x2x16xf32>
    %c0_16 = arith.constant 0 : index
    %c0_17 = arith.constant 0 : index
    %50 = vector.load %arg1[%c0_16, %c0_17] : memref<2x8xf32, #tpu.memory_space<vmem>>, vector<2x8xf32>
    %51 = vector.shape_cast %50 : vector<2x8xf32> to vector<1x2x8xf32>
    %52 = vector.shape_cast %51 : vector<1x2x8xf32> to vector<1x2x8xf32>
    %53 = vector.broadcast %52 : vector<1x2x8xf32> to vector<8x2x8xf32>
    %54 = tpu.concatenate %49, %53 in 2 : vector<8x2x16xf32>, vector<8x2x8xf32> -> vector<8x2x24xf32>
    %55 = vector.shape_cast %54 : vector<8x2x24xf32> to vector<4x2x2x24xf32>
    %56 = vector.extract_strided_slice %55 {offsets = [0, 0, 0, 0], sizes = [4, 1, 2, 24], strides = [1, 1, 1, 1]} : vector<4x2x2x24xf32> to vector<4x1x2x24xf32>
    %57 = vector.shape_cast %56 : vector<4x1x2x24xf32> to vector<4x2x24xf32>
    %58 = vector.extract_strided_slice %55 {offsets = [0, 1, 0, 0], sizes = [4, 1, 2, 24], strides = [1, 1, 1, 1]} : vector<4x2x2x24xf32> to vector<4x1x2x24xf32>
    %59 = vector.shape_cast %58 : vector<4x1x2x24xf32> to vector<4x2x24xf32>
    %60 = tpu.concatenate %57, %59 in 2 : vector<4x2x24xf32>, vector<4x2x24xf32> -> vector<4x2x48xf32>
    %c0_18 = arith.constant 0 : index
    %c0_19 = arith.constant 0 : index
    %61 = vector.load %arg3[%c0_18, %c0_19] : memref<48x256xbf16, #tpu.memory_space<vmem>>, vector<48x256xbf16>
    %c0_20 = arith.constant 0 : index
    %c0_21 = arith.constant 0 : index
    %62 = vector.load %arg4[%c0_20, %c0_21] : memref<64x256xbf16, #tpu.memory_space<vmem>>, vector<64x256xbf16>
    %c0_22 = arith.constant 0 : index
    %c0_23 = arith.constant 0 : index
    %63 = vector.load %arg5[%c0_22, %c0_23] : memref<1x256xf32, #tpu.memory_space<vmem>>, vector<1x256xf32>
    %64 = vector.shape_cast %60 : vector<4x2x48xf32> to vector<8x48xf32>
    %65 = arith.truncf %64 : vector<8x48xf32> to vector<8x48xbf16>
    %cst = arith.constant dense<0.000000e+00> : vector<8x256xf32>
    %66 = tpu.matmul %65, %61, %cst {dimension_numbers = #tpu.dot_dimension_numbers<[1], [0], [0], [1], [0, 0, 1, 1], [], []>} : vector<8x48xbf16>, vector<48x256xbf16>, vector<8x256xf32> -> vector<8x256xf32>
    %67 = vector.broadcast %63 : vector<1x256xf32> to vector<8x256xf32>
    %68 = arith.addf %66, %67 : vector<8x256xf32>
    %69 = vector.shape_cast %68 : vector<8x256xf32> to vector<4x2x256xf32>
    %cst_24 = arith.constant 0.000000e+00 : f32
    %70 = vector.broadcast %cst_24 : f32 to vector<2x32xf32>
    %cst_25 = arith.constant 0.000000e+00 : f32
    %71 = vector.broadcast %cst_25 : f32 to vector<2x32xf32>
    %cst_26 = arith.constant 0.000000e+00 : f32
    %72 = vector.broadcast %cst_26 : f32 to vector<2x32xf32>
    %cst_27 = arith.constant 0.000000e+00 : f32
    %73 = vector.broadcast %cst_27 : f32 to vector<2x32xf32>
    %74 = vector.extract_strided_slice %69 {offsets = [0, 0, 0], sizes = [1, 2, 128], strides = [1, 1, 1]} : vector<4x2x256xf32> to vector<1x2x128xf32>
    %75 = vector.shape_cast %74 : vector<1x2x128xf32> to vector<2x128xf32>
    %76 = vector.extract_strided_slice %69 {offsets = [3, 0, 128], sizes = [1, 2, 128], strides = [1, 1, 1]} : vector<4x2x256xf32> to vector<1x2x128xf32>
    %77 = vector.shape_cast %76 : vector<1x2x128xf32> to vector<2x128xf32>
    %78 = tpu.concatenate %75, %77 in 1 : vector<2x128xf32>, vector<2x128xf32> -> vector<2x256xf32>
    %79 = tpu.concatenate %70, %71 in 1 : vector<2x32xf32>, vector<2x32xf32> -> vector<2x64xf32>
    %80 = arith.truncf %79 : vector<2x64xf32> to vector<2x64xbf16>
    %cst_28 = arith.constant dense<0.000000e+00> : vector<2x256xf32>
    %81 = tpu.matmul %80, %62, %cst_28 {dimension_numbers = #tpu.dot_dimension_numbers<[1], [0], [0], [1], [0, 0, 1, 1], [], []>} : vector<2x64xbf16>, vector<64x256xbf16>, vector<2x256xf32> -> vector<2x256xf32>
    %82 = arith.addf %78, %81 : vector<2x256xf32>
    %83 = vector.extract_strided_slice %82 {offsets = [0, 0], sizes = [2, 128], strides = [1, 1]} : vector<2x256xf32> to vector<2x128xf32>
    %84 = vector.extract_strided_slice %83 {offsets = [0, 0], sizes = [2, 32], strides = [1, 1]} : vector<2x128xf32> to vector<2x32xf32>
    %85 = arith.negf %84 : vector<2x32xf32>
    %86 = math.exp %85 : vector<2x32xf32>
    %cst_29 = arith.constant 1.000000e+00 : f32
    %87 = vector.broadcast %cst_29 : f32 to vector<2x32xf32>
    %88 = arith.addf %87, %86 : vector<2x32xf32>
    %89 = arith.divf %87, %88 : vector<2x32xf32>
    %90 = vector.extract_strided_slice %83 {offsets = [0, 32], sizes = [2, 32], strides = [1, 1]} : vector<2x128xf32> to vector<2x32xf32>
    %91 = arith.negf %90 : vector<2x32xf32>
    %92 = math.exp %91 : vector<2x32xf32>
    %cst_30 = arith.constant 1.000000e+00 : f32
    %93 = vector.broadcast %cst_30 : f32 to vector<2x32xf32>
    %94 = arith.addf %93, %92 : vector<2x32xf32>
    %95 = arith.divf %93, %94 : vector<2x32xf32>
    %96 = vector.extract_strided_slice %83 {offsets = [0, 64], sizes = [2, 32], strides = [1, 1]} : vector<2x128xf32> to vector<2x32xf32>
    %97 = math.tanh %96 : vector<2x32xf32>
    %98 = vector.extract_strided_slice %83 {offsets = [0, 96], sizes = [2, 32], strides = [1, 1]} : vector<2x128xf32> to vector<2x32xf32>
    %99 = arith.negf %98 : vector<2x32xf32>
    %100 = math.exp %99 : vector<2x32xf32>
    %cst_31 = arith.constant 1.000000e+00 : f32
    %101 = vector.broadcast %cst_31 : f32 to vector<2x32xf32>
    %102 = arith.addf %101, %100 : vector<2x32xf32>
    %103 = arith.divf %101, %102 : vector<2x32xf32>
    %104 = arith.mulf %95, %72 : vector<2x32xf32>
    %105 = arith.mulf %89, %97 : vector<2x32xf32>
    %106 = arith.addf %104, %105 : vector<2x32xf32>
    %107 = math.tanh %106 : vector<2x32xf32>
    %108 = arith.mulf %103, %107 : vector<2x32xf32>
    %109 = vector.extract_strided_slice %82 {offsets = [0, 128], sizes = [2, 128], strides = [1, 1]} : vector<2x256xf32> to vector<2x128xf32>
    %110 = vector.extract_strided_slice %109 {offsets = [0, 0], sizes = [2, 32], strides = [1, 1]} : vector<2x128xf32> to vector<2x32xf32>
    %111 = arith.negf %110 : vector<2x32xf32>
    %112 = math.exp %111 : vector<2x32xf32>
    %cst_32 = arith.constant 1.000000e+00 : f32
    %113 = vector.broadcast %cst_32 : f32 to vector<2x32xf32>
    %114 = arith.addf %113, %112 : vector<2x32xf32>
    %115 = arith.divf %113, %114 : vector<2x32xf32>
    %116 = vector.extract_strided_slice %109 {offsets = [0, 32], sizes = [2, 32], strides = [1, 1]} : vector<2x128xf32> to vector<2x32xf32>
    %117 = arith.negf %116 : vector<2x32xf32>
    %118 = math.exp %117 : vector<2x32xf32>
    %cst_33 = arith.constant 1.000000e+00 : f32
    %119 = vector.broadcast %cst_33 : f32 to vector<2x32xf32>
    %120 = arith.addf %119, %118 : vector<2x32xf32>
    %121 = arith.divf %119, %120 : vector<2x32xf32>
    %122 = vector.extract_strided_slice %109 {offsets = [0, 64], sizes = [2, 32], strides = [1, 1]} : vector<2x128xf32> to vector<2x32xf32>
    %123 = math.tanh %122 : vector<2x32xf32>
    %124 = vector.extract_strided_slice %109 {offsets = [0, 96], sizes = [2, 32], strides = [1, 1]} : vector<2x128xf32> to vector<2x32xf32>
    %125 = arith.negf %124 : vector<2x32xf32>
    %126 = math.exp %125 : vector<2x32xf32>
    %cst_34 = arith.constant 1.000000e+00 : f32
    %127 = vector.broadcast %cst_34 : f32 to vector<2x32xf32>
    %128 = arith.addf %127, %126 : vector<2x32xf32>
    %129 = arith.divf %127, %128 : vector<2x32xf32>
    %130 = arith.mulf %121, %73 : vector<2x32xf32>
    %131 = arith.mulf %115, %123 : vector<2x32xf32>
    %132 = arith.addf %130, %131 : vector<2x32xf32>
    %133 = math.tanh %132 : vector<2x32xf32>
    %134 = arith.mulf %129, %133 : vector<2x32xf32>
    %135 = vector.extract_strided_slice %69 {offsets = [1, 0, 0], sizes = [1, 2, 128], strides = [1, 1, 1]} : vector<4x2x256xf32> to vector<1x2x128xf32>
    %136 = vector.shape_cast %135 : vector<1x2x128xf32> to vector<2x128xf32>
    %137 = vector.extract_strided_slice %69 {offsets = [2, 0, 128], sizes = [1, 2, 128], strides = [1, 1, 1]} : vector<4x2x256xf32> to vector<1x2x128xf32>
    %138 = vector.shape_cast %137 : vector<1x2x128xf32> to vector<2x128xf32>
    %139 = tpu.concatenate %136, %138 in 1 : vector<2x128xf32>, vector<2x128xf32> -> vector<2x256xf32>
    %140 = tpu.concatenate %108, %134 in 1 : vector<2x32xf32>, vector<2x32xf32> -> vector<2x64xf32>
    %141 = arith.truncf %140 : vector<2x64xf32> to vector<2x64xbf16>
    %cst_35 = arith.constant dense<0.000000e+00> : vector<2x256xf32>
    %142 = tpu.matmul %141, %62, %cst_35 {dimension_numbers = #tpu.dot_dimension_numbers<[1], [0], [0], [1], [0, 0, 1, 1], [], []>} : vector<2x64xbf16>, vector<64x256xbf16>, vector<2x256xf32> -> vector<2x256xf32>
    %143 = arith.addf %139, %142 : vector<2x256xf32>
    %144 = vector.extract_strided_slice %143 {offsets = [0, 0], sizes = [2, 128], strides = [1, 1]} : vector<2x256xf32> to vector<2x128xf32>
    %145 = vector.extract_strided_slice %144 {offsets = [0, 0], sizes = [2, 32], strides = [1, 1]} : vector<2x128xf32> to vector<2x32xf32>
    %146 = arith.negf %145 : vector<2x32xf32>
    %147 = math.exp %146 : vector<2x32xf32>
    %cst_36 = arith.constant 1.000000e+00 : f32
    %148 = vector.broadcast %cst_36 : f32 to vector<2x32xf32>
    %149 = arith.addf %148, %147 : vector<2x32xf32>
    %150 = arith.divf %148, %149 : vector<2x32xf32>
    %151 = vector.extract_strided_slice %144 {offsets = [0, 32], sizes = [2, 32], strides = [1, 1]} : vector<2x128xf32> to vector<2x32xf32>
    %152 = arith.negf %151 : vector<2x32xf32>
    %153 = math.exp %152 : vector<2x32xf32>
    %cst_37 = arith.constant 1.000000e+00 : f32
    %154 = vector.broadcast %cst_37 : f32 to vector<2x32xf32>
    %155 = arith.addf %154, %153 : vector<2x32xf32>
    %156 = arith.divf %154, %155 : vector<2x32xf32>
    %157 = vector.extract_strided_slice %144 {offsets = [0, 64], sizes = [2, 32], strides = [1, 1]} : vector<2x128xf32> to vector<2x32xf32>
    %158 = math.tanh %157 : vector<2x32xf32>
    %159 = vector.extract_strided_slice %144 {offsets = [0, 96], sizes = [2, 32], strides = [1, 1]} : vector<2x128xf32> to vector<2x32xf32>
    %160 = arith.negf %159 : vector<2x32xf32>
    %161 = math.exp %160 : vector<2x32xf32>
    %cst_38 = arith.constant 1.000000e+00 : f32
    %162 = vector.broadcast %cst_38 : f32 to vector<2x32xf32>
    %163 = arith.addf %162, %161 : vector<2x32xf32>
    %164 = arith.divf %162, %163 : vector<2x32xf32>
    %165 = arith.mulf %156, %106 : vector<2x32xf32>
    %166 = arith.mulf %150, %158 : vector<2x32xf32>
    %167 = arith.addf %165, %166 : vector<2x32xf32>
    %168 = math.tanh %167 : vector<2x32xf32>
    %169 = arith.mulf %164, %168 : vector<2x32xf32>
    %170 = vector.extract_strided_slice %143 {offsets = [0, 128], sizes = [2, 128], strides = [1, 1]} : vector<2x256xf32> to vector<2x128xf32>
    %171 = vector.extract_strided_slice %170 {offsets = [0, 0], sizes = [2, 32], strides = [1, 1]} : vector<2x128xf32> to vector<2x32xf32>
    %172 = arith.negf %171 : vector<2x32xf32>
    %173 = math.exp %172 : vector<2x32xf32>
    %cst_39 = arith.constant 1.000000e+00 : f32
    %174 = vector.broadcast %cst_39 : f32 to vector<2x32xf32>
    %175 = arith.addf %174, %173 : vector<2x32xf32>
    %176 = arith.divf %174, %175 : vector<2x32xf32>
    %177 = vector.extract_strided_slice %170 {offsets = [0, 32], sizes = [2, 32], strides = [1, 1]} : vector<2x128xf32> to vector<2x32xf32>
    %178 = arith.negf %177 : vector<2x32xf32>
    %179 = math.exp %178 : vector<2x32xf32>
    %cst_40 = arith.constant 1.000000e+00 : f32
    %180 = vector.broadcast %cst_40 : f32 to vector<2x32xf32>
    %181 = arith.addf %180, %179 : vector<2x32xf32>
    %182 = arith.divf %180, %181 : vector<2x32xf32>
    %183 = vector.extract_strided_slice %170 {offsets = [0, 64], sizes = [2, 32], strides = [1, 1]} : vector<2x128xf32> to vector<2x32xf32>
    %184 = math.tanh %183 : vector<2x32xf32>
    %185 = vector.extract_strided_slice %170 {offsets = [0, 96], sizes = [2, 32], strides = [1, 1]} : vector<2x128xf32> to vector<2x32xf32>
    %186 = arith.negf %185 : vector<2x32xf32>
    %187 = math.exp %186 : vector<2x32xf32>
    %cst_41 = arith.constant 1.000000e+00 : f32
    %188 = vector.broadcast %cst_41 : f32 to vector<2x32xf32>
    %189 = arith.addf %188, %187 : vector<2x32xf32>
    %190 = arith.divf %188, %189 : vector<2x32xf32>
    %191 = arith.mulf %182, %132 : vector<2x32xf32>
    %192 = arith.mulf %176, %184 : vector<2x32xf32>
    %193 = arith.addf %191, %192 : vector<2x32xf32>
    %194 = math.tanh %193 : vector<2x32xf32>
    %195 = arith.mulf %190, %194 : vector<2x32xf32>
    %196 = vector.extract_strided_slice %69 {offsets = [2, 0, 0], sizes = [1, 2, 128], strides = [1, 1, 1]} : vector<4x2x256xf32> to vector<1x2x128xf32>
    %197 = vector.shape_cast %196 : vector<1x2x128xf32> to vector<2x128xf32>
    %198 = vector.extract_strided_slice %69 {offsets = [1, 0, 128], sizes = [1, 2, 128], strides = [1, 1, 1]} : vector<4x2x256xf32> to vector<1x2x128xf32>
    %199 = vector.shape_cast %198 : vector<1x2x128xf32> to vector<2x128xf32>
    %200 = tpu.concatenate %197, %199 in 1 : vector<2x128xf32>, vector<2x128xf32> -> vector<2x256xf32>
    %201 = tpu.concatenate %169, %195 in 1 : vector<2x32xf32>, vector<2x32xf32> -> vector<2x64xf32>
    %202 = arith.truncf %201 : vector<2x64xf32> to vector<2x64xbf16>
    %cst_42 = arith.constant dense<0.000000e+00> : vector<2x256xf32>
    %203 = tpu.matmul %202, %62, %cst_42 {dimension_numbers = #tpu.dot_dimension_numbers<[1], [0], [0], [1], [0, 0, 1, 1], [], []>} : vector<2x64xbf16>, vector<64x256xbf16>, vector<2x256xf32> -> vector<2x256xf32>
    %204 = arith.addf %200, %203 : vector<2x256xf32>
    %205 = vector.extract_strided_slice %204 {offsets = [0, 0], sizes = [2, 128], strides = [1, 1]} : vector<2x256xf32> to vector<2x128xf32>
    %206 = vector.extract_strided_slice %205 {offsets = [0, 0], sizes = [2, 32], strides = [1, 1]} : vector<2x128xf32> to vector<2x32xf32>
    %207 = arith.negf %206 : vector<2x32xf32>
    %208 = math.exp %207 : vector<2x32xf32>
    %cst_43 = arith.constant 1.000000e+00 : f32
    %209 = vector.broadcast %cst_43 : f32 to vector<2x32xf32>
    %210 = arith.addf %209, %208 : vector<2x32xf32>
    %211 = arith.divf %209, %210 : vector<2x32xf32>
    %212 = vector.extract_strided_slice %205 {offsets = [0, 32], sizes = [2, 32], strides = [1, 1]} : vector<2x128xf32> to vector<2x32xf32>
    %213 = arith.negf %212 : vector<2x32xf32>
    %214 = math.exp %213 : vector<2x32xf32>
    %cst_44 = arith.constant 1.000000e+00 : f32
    %215 = vector.broadcast %cst_44 : f32 to vector<2x32xf32>
    %216 = arith.addf %215, %214 : vector<2x32xf32>
    %217 = arith.divf %215, %216 : vector<2x32xf32>
    %218 = vector.extract_strided_slice %205 {offsets = [0, 64], sizes = [2, 32], strides = [1, 1]} : vector<2x128xf32> to vector<2x32xf32>
    %219 = math.tanh %218 : vector<2x32xf32>
    %220 = vector.extract_strided_slice %205 {offsets = [0, 96], sizes = [2, 32], strides = [1, 1]} : vector<2x128xf32> to vector<2x32xf32>
    %221 = arith.negf %220 : vector<2x32xf32>
    %222 = math.exp %221 : vector<2x32xf32>
    %cst_45 = arith.constant 1.000000e+00 : f32
    %223 = vector.broadcast %cst_45 : f32 to vector<2x32xf32>
    %224 = arith.addf %223, %222 : vector<2x32xf32>
    %225 = arith.divf %223, %224 : vector<2x32xf32>
    %226 = arith.mulf %217, %167 : vector<2x32xf32>
    %227 = arith.mulf %211, %219 : vector<2x32xf32>
    %228 = arith.addf %226, %227 : vector<2x32xf32>
    %229 = math.tanh %228 : vector<2x32xf32>
    %230 = arith.mulf %225, %229 : vector<2x32xf32>
    %231 = vector.extract_strided_slice %204 {offsets = [0, 128], sizes = [2, 128], strides = [1, 1]} : vector<2x256xf32> to vector<2x128xf32>
    %232 = vector.extract_strided_slice %231 {offsets = [0, 0], sizes = [2, 32], strides = [1, 1]} : vector<2x128xf32> to vector<2x32xf32>
    %233 = arith.negf %232 : vector<2x32xf32>
    %234 = math.exp %233 : vector<2x32xf32>
    %cst_46 = arith.constant 1.000000e+00 : f32
    %235 = vector.broadcast %cst_46 : f32 to vector<2x32xf32>
    %236 = arith.addf %235, %234 : vector<2x32xf32>
    %237 = arith.divf %235, %236 : vector<2x32xf32>
    %238 = vector.extract_strided_slice %231 {offsets = [0, 32], sizes = [2, 32], strides = [1, 1]} : vector<2x128xf32> to vector<2x32xf32>
    %239 = arith.negf %238 : vector<2x32xf32>
    %240 = math.exp %239 : vector<2x32xf32>
    %cst_47 = arith.constant 1.000000e+00 : f32
    %241 = vector.broadcast %cst_47 : f32 to vector<2x32xf32>
    %242 = arith.addf %241, %240 : vector<2x32xf32>
    %243 = arith.divf %241, %242 : vector<2x32xf32>
    %244 = vector.extract_strided_slice %231 {offsets = [0, 64], sizes = [2, 32], strides = [1, 1]} : vector<2x128xf32> to vector<2x32xf32>
    %245 = math.tanh %244 : vector<2x32xf32>
    %246 = vector.extract_strided_slice %231 {offsets = [0, 96], sizes = [2, 32], strides = [1, 1]} : vector<2x128xf32> to vector<2x32xf32>
    %247 = arith.negf %246 : vector<2x32xf32>
    %248 = math.exp %247 : vector<2x32xf32>
    %cst_48 = arith.constant 1.000000e+00 : f32
    %249 = vector.broadcast %cst_48 : f32 to vector<2x32xf32>
    %250 = arith.addf %249, %248 : vector<2x32xf32>
    %251 = arith.divf %249, %250 : vector<2x32xf32>
    %252 = arith.mulf %243, %193 : vector<2x32xf32>
    %253 = arith.mulf %237, %245 : vector<2x32xf32>
    %254 = arith.addf %252, %253 : vector<2x32xf32>
    %255 = math.tanh %254 : vector<2x32xf32>
    %256 = arith.mulf %251, %255 : vector<2x32xf32>
    %257 = vector.extract_strided_slice %69 {offsets = [3, 0, 0], sizes = [1, 2, 128], strides = [1, 1, 1]} : vector<4x2x256xf32> to vector<1x2x128xf32>
    %258 = vector.shape_cast %257 : vector<1x2x128xf32> to vector<2x128xf32>
    %259 = vector.extract_strided_slice %69 {offsets = [0, 0, 128], sizes = [1, 2, 128], strides = [1, 1, 1]} : vector<4x2x256xf32> to vector<1x2x128xf32>
    %260 = vector.shape_cast %259 : vector<1x2x128xf32> to vector<2x128xf32>
    %261 = tpu.concatenate %258, %260 in 1 : vector<2x128xf32>, vector<2x128xf32> -> vector<2x256xf32>
    %262 = tpu.concatenate %230, %256 in 1 : vector<2x32xf32>, vector<2x32xf32> -> vector<2x64xf32>
    %263 = arith.truncf %262 : vector<2x64xf32> to vector<2x64xbf16>
    %cst_49 = arith.constant dense<0.000000e+00> : vector<2x256xf32>
    %264 = tpu.matmul %263, %62, %cst_49 {dimension_numbers = #tpu.dot_dimension_numbers<[1], [0], [0], [1], [0, 0, 1, 1], [], []>} : vector<2x64xbf16>, vector<64x256xbf16>, vector<2x256xf32> -> vector<2x256xf32>
    %265 = arith.addf %261, %264 : vector<2x256xf32>
    %266 = vector.extract_strided_slice %265 {offsets = [0, 0], sizes = [2, 128], strides = [1, 1]} : vector<2x256xf32> to vector<2x128xf32>
    %267 = vector.extract_strided_slice %266 {offsets = [0, 0], sizes = [2, 32], strides = [1, 1]} : vector<2x128xf32> to vector<2x32xf32>
    %268 = arith.negf %267 : vector<2x32xf32>
    %269 = math.exp %268 : vector<2x32xf32>
    %cst_50 = arith.constant 1.000000e+00 : f32
    %270 = vector.broadcast %cst_50 : f32 to vector<2x32xf32>
    %271 = arith.addf %270, %269 : vector<2x32xf32>
    %272 = arith.divf %270, %271 : vector<2x32xf32>
    %273 = vector.extract_strided_slice %266 {offsets = [0, 32], sizes = [2, 32], strides = [1, 1]} : vector<2x128xf32> to vector<2x32xf32>
    %274 = arith.negf %273 : vector<2x32xf32>
    %275 = math.exp %274 : vector<2x32xf32>
    %cst_51 = arith.constant 1.000000e+00 : f32
    %276 = vector.broadcast %cst_51 : f32 to vector<2x32xf32>
    %277 = arith.addf %276, %275 : vector<2x32xf32>
    %278 = arith.divf %276, %277 : vector<2x32xf32>
    %279 = vector.extract_strided_slice %266 {offsets = [0, 64], sizes = [2, 32], strides = [1, 1]} : vector<2x128xf32> to vector<2x32xf32>
    %280 = math.tanh %279 : vector<2x32xf32>
    %281 = vector.extract_strided_slice %266 {offsets = [0, 96], sizes = [2, 32], strides = [1, 1]} : vector<2x128xf32> to vector<2x32xf32>
    %282 = arith.negf %281 : vector<2x32xf32>
    %283 = math.exp %282 : vector<2x32xf32>
    %cst_52 = arith.constant 1.000000e+00 : f32
    %284 = vector.broadcast %cst_52 : f32 to vector<2x32xf32>
    %285 = arith.addf %284, %283 : vector<2x32xf32>
    %286 = arith.divf %284, %285 : vector<2x32xf32>
    %287 = arith.mulf %278, %228 : vector<2x32xf32>
    %288 = arith.mulf %272, %280 : vector<2x32xf32>
    %289 = arith.addf %287, %288 : vector<2x32xf32>
    %290 = math.tanh %289 : vector<2x32xf32>
    %291 = arith.mulf %286, %290 : vector<2x32xf32>
    %292 = vector.extract_strided_slice %265 {offsets = [0, 128], sizes = [2, 128], strides = [1, 1]} : vector<2x256xf32> to vector<2x128xf32>
    %293 = vector.extract_strided_slice %292 {offsets = [0, 0], sizes = [2, 32], strides = [1, 1]} : vector<2x128xf32> to vector<2x32xf32>
    %294 = arith.negf %293 : vector<2x32xf32>
    %295 = math.exp %294 : vector<2x32xf32>
    %cst_53 = arith.constant 1.000000e+00 : f32
    %296 = vector.broadcast %cst_53 : f32 to vector<2x32xf32>
    %297 = arith.addf %296, %295 : vector<2x32xf32>
    %298 = arith.divf %296, %297 : vector<2x32xf32>
    %299 = vector.extract_strided_slice %292 {offsets = [0, 32], sizes = [2, 32], strides = [1, 1]} : vector<2x128xf32> to vector<2x32xf32>
    %300 = arith.negf %299 : vector<2x32xf32>
    %301 = math.exp %300 : vector<2x32xf32>
    %cst_54 = arith.constant 1.000000e+00 : f32
    %302 = vector.broadcast %cst_54 : f32 to vector<2x32xf32>
    %303 = arith.addf %302, %301 : vector<2x32xf32>
    %304 = arith.divf %302, %303 : vector<2x32xf32>
    %305 = vector.extract_strided_slice %292 {offsets = [0, 64], sizes = [2, 32], strides = [1, 1]} : vector<2x128xf32> to vector<2x32xf32>
    %306 = math.tanh %305 : vector<2x32xf32>
    %307 = vector.extract_strided_slice %292 {offsets = [0, 96], sizes = [2, 32], strides = [1, 1]} : vector<2x128xf32> to vector<2x32xf32>
    %308 = arith.negf %307 : vector<2x32xf32>
    %309 = math.exp %308 : vector<2x32xf32>
    %cst_55 = arith.constant 1.000000e+00 : f32
    %310 = vector.broadcast %cst_55 : f32 to vector<2x32xf32>
    %311 = arith.addf %310, %309 : vector<2x32xf32>
    %312 = arith.divf %310, %311 : vector<2x32xf32>
    %313 = arith.mulf %304, %254 : vector<2x32xf32>
    %314 = arith.mulf %298, %306 : vector<2x32xf32>
    %315 = arith.addf %313, %314 : vector<2x32xf32>
    %316 = math.tanh %315 : vector<2x32xf32>
    %317 = arith.mulf %312, %316 : vector<2x32xf32>
    %318 = tpu.concatenate %108, %317, %169, %256 in 1 : vector<2x32xf32>, vector<2x32xf32>, vector<2x32xf32>, vector<2x32xf32> -> vector<2x128xf32>
    %319 = vector.shape_cast %318 : vector<2x128xf32> to vector<1x2x128xf32>
    %320 = tpu.concatenate %230, %195, %291, %134 in 1 : vector<2x32xf32>, vector<2x32xf32>, vector<2x32xf32>, vector<2x32xf32> -> vector<2x128xf32>
    %321 = vector.shape_cast %320 : vector<2x128xf32> to vector<1x2x128xf32>
    %322 = tpu.concatenate %319, %321 in 0 : vector<1x2x128xf32>, vector<1x2x128xf32> -> vector<2x2x128xf32>
    %c0_56 = arith.constant 0 : index
    %c0_57 = arith.constant 0 : index
    %323 = vector.load %arg6[%c0_56, %c0_57] : memref<128x256xbf16, #tpu.memory_space<vmem>>, vector<128x256xbf16>
    %c0_58 = arith.constant 0 : index
    %c0_59 = arith.constant 0 : index
    %324 = vector.load %arg7[%c0_58, %c0_59] : memref<64x256xbf16, #tpu.memory_space<vmem>>, vector<64x256xbf16>
    %c0_60 = arith.constant 0 : index
    %c0_61 = arith.constant 0 : index
    %325 = vector.load %arg8[%c0_60, %c0_61] : memref<1x256xf32, #tpu.memory_space<vmem>>, vector<1x256xf32>
    %326 = vector.shape_cast %322 : vector<2x2x128xf32> to vector<4x128xf32>
    %327 = arith.truncf %326 : vector<4x128xf32> to vector<4x128xbf16>
    %cst_62 = arith.constant dense<0.000000e+00> : vector<4x256xf32>
    %328 = tpu.matmul %327, %323, %cst_62 {dimension_numbers = #tpu.dot_dimension_numbers<[1], [0], [0], [1], [0, 0, 1, 1], [], []>} : vector<4x128xbf16>, vector<128x256xbf16>, vector<4x256xf32> -> vector<4x256xf32>
    %329 = vector.broadcast %325 : vector<1x256xf32> to vector<4x256xf32>
    %330 = arith.addf %328, %329 : vector<4x256xf32>
    %331 = vector.shape_cast %330 : vector<4x256xf32> to vector<2x2x256xf32>
    %cst_63 = arith.constant 0.000000e+00 : f32
    %332 = vector.broadcast %cst_63 : f32 to vector<2x32xf32>
    %cst_64 = arith.constant 0.000000e+00 : f32
    %333 = vector.broadcast %cst_64 : f32 to vector<2x32xf32>
    %cst_65 = arith.constant 0.000000e+00 : f32
    %334 = vector.broadcast %cst_65 : f32 to vector<2x32xf32>
    %cst_66 = arith.constant 0.000000e+00 : f32
    %335 = vector.broadcast %cst_66 : f32 to vector<2x32xf32>
    %336 = vector.extract_strided_slice %331 {offsets = [0, 0, 0], sizes = [1, 2, 128], strides = [1, 1, 1]} : vector<2x2x256xf32> to vector<1x2x128xf32>
    %337 = vector.shape_cast %336 : vector<1x2x128xf32> to vector<2x128xf32>
    %338 = vector.extract_strided_slice %331 {offsets = [1, 0, 128], sizes = [1, 2, 128], strides = [1, 1, 1]} : vector<2x2x256xf32> to vector<1x2x128xf32>
    %339 = vector.shape_cast %338 : vector<1x2x128xf32> to vector<2x128xf32>
    %340 = tpu.concatenate %337, %339 in 1 : vector<2x128xf32>, vector<2x128xf32> -> vector<2x256xf32>
    %341 = tpu.concatenate %332, %333 in 1 : vector<2x32xf32>, vector<2x32xf32> -> vector<2x64xf32>
    %342 = arith.truncf %341 : vector<2x64xf32> to vector<2x64xbf16>
    %cst_67 = arith.constant dense<0.000000e+00> : vector<2x256xf32>
    %343 = tpu.matmul %342, %324, %cst_67 {dimension_numbers = #tpu.dot_dimension_numbers<[1], [0], [0], [1], [0, 0, 1, 1], [], []>} : vector<2x64xbf16>, vector<64x256xbf16>, vector<2x256xf32> -> vector<2x256xf32>
    %344 = arith.addf %340, %343 : vector<2x256xf32>
    %345 = vector.extract_strided_slice %344 {offsets = [0, 0], sizes = [2, 128], strides = [1, 1]} : vector<2x256xf32> to vector<2x128xf32>
    %346 = vector.extract_strided_slice %345 {offsets = [0, 0], sizes = [2, 32], strides = [1, 1]} : vector<2x128xf32> to vector<2x32xf32>
    %347 = arith.negf %346 : vector<2x32xf32>
    %348 = math.exp %347 : vector<2x32xf32>
    %cst_68 = arith.constant 1.000000e+00 : f32
    %349 = vector.broadcast %cst_68 : f32 to vector<2x32xf32>
    %350 = arith.addf %349, %348 : vector<2x32xf32>
    %351 = arith.divf %349, %350 : vector<2x32xf32>
    %352 = vector.extract_strided_slice %345 {offsets = [0, 32], sizes = [2, 32], strides = [1, 1]} : vector<2x128xf32> to vector<2x32xf32>
    %353 = arith.negf %352 : vector<2x32xf32>
    %354 = math.exp %353 : vector<2x32xf32>
    %cst_69 = arith.constant 1.000000e+00 : f32
    %355 = vector.broadcast %cst_69 : f32 to vector<2x32xf32>
    %356 = arith.addf %355, %354 : vector<2x32xf32>
    %357 = arith.divf %355, %356 : vector<2x32xf32>
    %358 = vector.extract_strided_slice %345 {offsets = [0, 64], sizes = [2, 32], strides = [1, 1]} : vector<2x128xf32> to vector<2x32xf32>
    %359 = math.tanh %358 : vector<2x32xf32>
    %360 = vector.extract_strided_slice %345 {offsets = [0, 96], sizes = [2, 32], strides = [1, 1]} : vector<2x128xf32> to vector<2x32xf32>
    %361 = arith.negf %360 : vector<2x32xf32>
    %362 = math.exp %361 : vector<2x32xf32>
    %cst_70 = arith.constant 1.000000e+00 : f32
    %363 = vector.broadcast %cst_70 : f32 to vector<2x32xf32>
    %364 = arith.addf %363, %362 : vector<2x32xf32>
    %365 = arith.divf %363, %364 : vector<2x32xf32>
    %366 = arith.mulf %357, %334 : vector<2x32xf32>
    %367 = arith.mulf %351, %359 : vector<2x32xf32>
    %368 = arith.addf %366, %367 : vector<2x32xf32>
    %369 = math.tanh %368 : vector<2x32xf32>
    %370 = arith.mulf %365, %369 : vector<2x32xf32>
    %371 = vector.extract_strided_slice %344 {offsets = [0, 128], sizes = [2, 128], strides = [1, 1]} : vector<2x256xf32> to vector<2x128xf32>
    %372 = vector.extract_strided_slice %371 {offsets = [0, 0], sizes = [2, 32], strides = [1, 1]} : vector<2x128xf32> to vector<2x32xf32>
    %373 = arith.negf %372 : vector<2x32xf32>
    %374 = math.exp %373 : vector<2x32xf32>
    %cst_71 = arith.constant 1.000000e+00 : f32
    %375 = vector.broadcast %cst_71 : f32 to vector<2x32xf32>
    %376 = arith.addf %375, %374 : vector<2x32xf32>
    %377 = arith.divf %375, %376 : vector<2x32xf32>
    %378 = vector.extract_strided_slice %371 {offsets = [0, 32], sizes = [2, 32], strides = [1, 1]} : vector<2x128xf32> to vector<2x32xf32>
    %379 = arith.negf %378 : vector<2x32xf32>
    %380 = math.exp %379 : vector<2x32xf32>
    %cst_72 = arith.constant 1.000000e+00 : f32
    %381 = vector.broadcast %cst_72 : f32 to vector<2x32xf32>
    %382 = arith.addf %381, %380 : vector<2x32xf32>
    %383 = arith.divf %381, %382 : vector<2x32xf32>
    %384 = vector.extract_strided_slice %371 {offsets = [0, 64], sizes = [2, 32], strides = [1, 1]} : vector<2x128xf32> to vector<2x32xf32>
    %385 = math.tanh %384 : vector<2x32xf32>
    %386 = vector.extract_strided_slice %371 {offsets = [0, 96], sizes = [2, 32], strides = [1, 1]} : vector<2x128xf32> to vector<2x32xf32>
    %387 = arith.negf %386 : vector<2x32xf32>
    %388 = math.exp %387 : vector<2x32xf32>
    %cst_73 = arith.constant 1.000000e+00 : f32
    %389 = vector.broadcast %cst_73 : f32 to vector<2x32xf32>
    %390 = arith.addf %389, %388 : vector<2x32xf32>
    %391 = arith.divf %389, %390 : vector<2x32xf32>
    %392 = arith.mulf %383, %335 : vector<2x32xf32>
    %393 = arith.mulf %377, %385 : vector<2x32xf32>
    %394 = arith.addf %392, %393 : vector<2x32xf32>
    %395 = math.tanh %394 : vector<2x32xf32>
    %396 = arith.mulf %391, %395 : vector<2x32xf32>
    %397 = vector.extract_strided_slice %331 {offsets = [1, 0, 0], sizes = [1, 2, 128], strides = [1, 1, 1]} : vector<2x2x256xf32> to vector<1x2x128xf32>
    %398 = vector.shape_cast %397 : vector<1x2x128xf32> to vector<2x128xf32>
    %399 = vector.extract_strided_slice %331 {offsets = [0, 0, 128], sizes = [1, 2, 128], strides = [1, 1, 1]} : vector<2x2x256xf32> to vector<1x2x128xf32>
    %400 = vector.shape_cast %399 : vector<1x2x128xf32> to vector<2x128xf32>
    %401 = tpu.concatenate %398, %400 in 1 : vector<2x128xf32>, vector<2x128xf32> -> vector<2x256xf32>
    %402 = tpu.concatenate %370, %396 in 1 : vector<2x32xf32>, vector<2x32xf32> -> vector<2x64xf32>
    %403 = arith.truncf %402 : vector<2x64xf32> to vector<2x64xbf16>
    %cst_74 = arith.constant dense<0.000000e+00> : vector<2x256xf32>
    %404 = tpu.matmul %403, %324, %cst_74 {dimension_numbers = #tpu.dot_dimension_numbers<[1], [0], [0], [1], [0, 0, 1, 1], [], []>} : vector<2x64xbf16>, vector<64x256xbf16>, vector<2x256xf32> -> vector<2x256xf32>
    %405 = arith.addf %401, %404 : vector<2x256xf32>
    %406 = vector.extract_strided_slice %405 {offsets = [0, 0], sizes = [2, 128], strides = [1, 1]} : vector<2x256xf32> to vector<2x128xf32>
    %407 = vector.extract_strided_slice %406 {offsets = [0, 0], sizes = [2, 32], strides = [1, 1]} : vector<2x128xf32> to vector<2x32xf32>
    %408 = arith.negf %407 : vector<2x32xf32>
    %409 = math.exp %408 : vector<2x32xf32>
    %cst_75 = arith.constant 1.000000e+00 : f32
    %410 = vector.broadcast %cst_75 : f32 to vector<2x32xf32>
    %411 = arith.addf %410, %409 : vector<2x32xf32>
    %412 = arith.divf %410, %411 : vector<2x32xf32>
    %413 = vector.extract_strided_slice %406 {offsets = [0, 32], sizes = [2, 32], strides = [1, 1]} : vector<2x128xf32> to vector<2x32xf32>
    %414 = arith.negf %413 : vector<2x32xf32>
    %415 = math.exp %414 : vector<2x32xf32>
    %cst_76 = arith.constant 1.000000e+00 : f32
    %416 = vector.broadcast %cst_76 : f32 to vector<2x32xf32>
    %417 = arith.addf %416, %415 : vector<2x32xf32>
    %418 = arith.divf %416, %417 : vector<2x32xf32>
    %419 = vector.extract_strided_slice %406 {offsets = [0, 64], sizes = [2, 32], strides = [1, 1]} : vector<2x128xf32> to vector<2x32xf32>
    %420 = math.tanh %419 : vector<2x32xf32>
    %421 = vector.extract_strided_slice %406 {offsets = [0, 96], sizes = [2, 32], strides = [1, 1]} : vector<2x128xf32> to vector<2x32xf32>
    %422 = arith.negf %421 : vector<2x32xf32>
    %423 = math.exp %422 : vector<2x32xf32>
    %cst_77 = arith.constant 1.000000e+00 : f32
    %424 = vector.broadcast %cst_77 : f32 to vector<2x32xf32>
    %425 = arith.addf %424, %423 : vector<2x32xf32>
    %426 = arith.divf %424, %425 : vector<2x32xf32>
    %427 = arith.mulf %418, %368 : vector<2x32xf32>
    %428 = arith.mulf %412, %420 : vector<2x32xf32>
    %429 = arith.addf %427, %428 : vector<2x32xf32>
    %430 = math.tanh %429 : vector<2x32xf32>
    %431 = arith.mulf %426, %430 : vector<2x32xf32>
    %432 = vector.extract_strided_slice %405 {offsets = [0, 128], sizes = [2, 128], strides = [1, 1]} : vector<2x256xf32> to vector<2x128xf32>
    %433 = vector.extract_strided_slice %432 {offsets = [0, 0], sizes = [2, 32], strides = [1, 1]} : vector<2x128xf32> to vector<2x32xf32>
    %434 = arith.negf %433 : vector<2x32xf32>
    %435 = math.exp %434 : vector<2x32xf32>
    %cst_78 = arith.constant 1.000000e+00 : f32
    %436 = vector.broadcast %cst_78 : f32 to vector<2x32xf32>
    %437 = arith.addf %436, %435 : vector<2x32xf32>
    %438 = arith.divf %436, %437 : vector<2x32xf32>
    %439 = vector.extract_strided_slice %432 {offsets = [0, 32], sizes = [2, 32], strides = [1, 1]} : vector<2x128xf32> to vector<2x32xf32>
    %440 = arith.negf %439 : vector<2x32xf32>
    %441 = math.exp %440 : vector<2x32xf32>
    %cst_79 = arith.constant 1.000000e+00 : f32
    %442 = vector.broadcast %cst_79 : f32 to vector<2x32xf32>
    %443 = arith.addf %442, %441 : vector<2x32xf32>
    %444 = arith.divf %442, %443 : vector<2x32xf32>
    %445 = vector.extract_strided_slice %432 {offsets = [0, 64], sizes = [2, 32], strides = [1, 1]} : vector<2x128xf32> to vector<2x32xf32>
    %446 = math.tanh %445 : vector<2x32xf32>
    %447 = vector.extract_strided_slice %432 {offsets = [0, 96], sizes = [2, 32], strides = [1, 1]} : vector<2x128xf32> to vector<2x32xf32>
    %448 = arith.negf %447 : vector<2x32xf32>
    %449 = math.exp %448 : vector<2x32xf32>
    %cst_80 = arith.constant 1.000000e+00 : f32
    %450 = vector.broadcast %cst_80 : f32 to vector<2x32xf32>
    %451 = arith.addf %450, %449 : vector<2x32xf32>
    %452 = arith.divf %450, %451 : vector<2x32xf32>
    %453 = arith.mulf %444, %394 : vector<2x32xf32>
    %454 = arith.mulf %438, %446 : vector<2x32xf32>
    %455 = arith.addf %453, %454 : vector<2x32xf32>
    %456 = math.tanh %455 : vector<2x32xf32>
    %457 = arith.mulf %452, %456 : vector<2x32xf32>
    %458 = tpu.concatenate %370, %457, %431, %396 in 1 : vector<2x32xf32>, vector<2x32xf32>, vector<2x32xf32>, vector<2x32xf32> -> vector<2x128xf32>
    %459 = vector.shape_cast %458 : vector<2x128xf32> to vector<1x2x128xf32>
    %c0_81 = arith.constant 0 : index
    %c0_82 = arith.constant 0 : index
    %460 = vector.load %arg9[%c0_81, %c0_82] : memref<128x256xbf16, #tpu.memory_space<vmem>>, vector<128x256xbf16>
    %c0_83 = arith.constant 0 : index
    %c0_84 = arith.constant 0 : index
    %461 = vector.load %arg10[%c0_83, %c0_84] : memref<64x256xbf16, #tpu.memory_space<vmem>>, vector<64x256xbf16>
    %c0_85 = arith.constant 0 : index
    %c0_86 = arith.constant 0 : index
    %462 = vector.load %arg11[%c0_85, %c0_86] : memref<1x256xf32, #tpu.memory_space<vmem>>, vector<1x256xf32>
    %463 = vector.shape_cast %459 : vector<1x2x128xf32> to vector<2x128xf32>
    %464 = arith.truncf %463 : vector<2x128xf32> to vector<2x128xbf16>
    %cst_87 = arith.constant dense<0.000000e+00> : vector<2x256xf32>
    %465 = tpu.matmul %464, %460, %cst_87 {dimension_numbers = #tpu.dot_dimension_numbers<[1], [0], [0], [1], [0, 0, 1, 1], [], []>} : vector<2x128xbf16>, vector<128x256xbf16>, vector<2x256xf32> -> vector<2x256xf32>
    %466 = vector.broadcast %462 : vector<1x256xf32> to vector<2x256xf32>
    %467 = arith.addf %465, %466 : vector<2x256xf32>
    %468 = vector.shape_cast %467 : vector<2x256xf32> to vector<1x2x256xf32>
    %cst_88 = arith.constant 0.000000e+00 : f32
    %469 = vector.broadcast %cst_88 : f32 to vector<2x32xf32>
    %cst_89 = arith.constant 0.000000e+00 : f32
    %470 = vector.broadcast %cst_89 : f32 to vector<2x32xf32>
    %cst_90 = arith.constant 0.000000e+00 : f32
    %471 = vector.broadcast %cst_90 : f32 to vector<2x32xf32>
    %cst_91 = arith.constant 0.000000e+00 : f32
    %472 = vector.broadcast %cst_91 : f32 to vector<2x32xf32>
    %473 = vector.extract_strided_slice %468 {offsets = [0, 0, 0], sizes = [1, 2, 128], strides = [1, 1, 1]} : vector<1x2x256xf32> to vector<1x2x128xf32>
    %474 = vector.shape_cast %473 : vector<1x2x128xf32> to vector<2x128xf32>
    %475 = vector.extract_strided_slice %468 {offsets = [0, 0, 128], sizes = [1, 2, 128], strides = [1, 1, 1]} : vector<1x2x256xf32> to vector<1x2x128xf32>
    %476 = vector.shape_cast %475 : vector<1x2x128xf32> to vector<2x128xf32>
    %477 = tpu.concatenate %474, %476 in 1 : vector<2x128xf32>, vector<2x128xf32> -> vector<2x256xf32>
    %478 = tpu.concatenate %469, %470 in 1 : vector<2x32xf32>, vector<2x32xf32> -> vector<2x64xf32>
    %479 = arith.truncf %478 : vector<2x64xf32> to vector<2x64xbf16>
    %cst_92 = arith.constant dense<0.000000e+00> : vector<2x256xf32>
    %480 = tpu.matmul %479, %461, %cst_92 {dimension_numbers = #tpu.dot_dimension_numbers<[1], [0], [0], [1], [0, 0, 1, 1], [], []>} : vector<2x64xbf16>, vector<64x256xbf16>, vector<2x256xf32> -> vector<2x256xf32>
    %481 = arith.addf %477, %480 : vector<2x256xf32>
    %482 = vector.extract_strided_slice %481 {offsets = [0, 0], sizes = [2, 128], strides = [1, 1]} : vector<2x256xf32> to vector<2x128xf32>
    %483 = vector.extract_strided_slice %482 {offsets = [0, 0], sizes = [2, 32], strides = [1, 1]} : vector<2x128xf32> to vector<2x32xf32>
    %484 = arith.negf %483 : vector<2x32xf32>
    %485 = math.exp %484 : vector<2x32xf32>
    %cst_93 = arith.constant 1.000000e+00 : f32
    %486 = vector.broadcast %cst_93 : f32 to vector<2x32xf32>
    %487 = arith.addf %486, %485 : vector<2x32xf32>
    %488 = arith.divf %486, %487 : vector<2x32xf32>
    %489 = vector.extract_strided_slice %482 {offsets = [0, 32], sizes = [2, 32], strides = [1, 1]} : vector<2x128xf32> to vector<2x32xf32>
    %490 = arith.negf %489 : vector<2x32xf32>
    %491 = math.exp %490 : vector<2x32xf32>
    %cst_94 = arith.constant 1.000000e+00 : f32
    %492 = vector.broadcast %cst_94 : f32 to vector<2x32xf32>
    %493 = arith.addf %492, %491 : vector<2x32xf32>
    %494 = arith.divf %492, %493 : vector<2x32xf32>
    %495 = vector.extract_strided_slice %482 {offsets = [0, 64], sizes = [2, 32], strides = [1, 1]} : vector<2x128xf32> to vector<2x32xf32>
    %496 = math.tanh %495 : vector<2x32xf32>
    %497 = vector.extract_strided_slice %482 {offsets = [0, 96], sizes = [2, 32], strides = [1, 1]} : vector<2x128xf32> to vector<2x32xf32>
    %498 = arith.negf %497 : vector<2x32xf32>
    %499 = math.exp %498 : vector<2x32xf32>
    %cst_95 = arith.constant 1.000000e+00 : f32
    %500 = vector.broadcast %cst_95 : f32 to vector<2x32xf32>
    %501 = arith.addf %500, %499 : vector<2x32xf32>
    %502 = arith.divf %500, %501 : vector<2x32xf32>
    %503 = arith.mulf %494, %471 : vector<2x32xf32>
    %504 = arith.mulf %488, %496 : vector<2x32xf32>
    %505 = arith.addf %503, %504 : vector<2x32xf32>
    %506 = math.tanh %505 : vector<2x32xf32>
    %507 = arith.mulf %502, %506 : vector<2x32xf32>
    %508 = vector.extract_strided_slice %481 {offsets = [0, 128], sizes = [2, 128], strides = [1, 1]} : vector<2x256xf32> to vector<2x128xf32>
    %509 = vector.extract_strided_slice %508 {offsets = [0, 0], sizes = [2, 32], strides = [1, 1]} : vector<2x128xf32> to vector<2x32xf32>
    %510 = arith.negf %509 : vector<2x32xf32>
    %511 = math.exp %510 : vector<2x32xf32>
    %cst_96 = arith.constant 1.000000e+00 : f32
    %512 = vector.broadcast %cst_96 : f32 to vector<2x32xf32>
    %513 = arith.addf %512, %511 : vector<2x32xf32>
    %514 = arith.divf %512, %513 : vector<2x32xf32>
    %515 = vector.extract_strided_slice %508 {offsets = [0, 32], sizes = [2, 32], strides = [1, 1]} : vector<2x128xf32> to vector<2x32xf32>
    %516 = arith.negf %515 : vector<2x32xf32>
    %517 = math.exp %516 : vector<2x32xf32>
    %cst_97 = arith.constant 1.000000e+00 : f32
    %518 = vector.broadcast %cst_97 : f32 to vector<2x32xf32>
    %519 = arith.addf %518, %517 : vector<2x32xf32>
    %520 = arith.divf %518, %519 : vector<2x32xf32>
    %521 = vector.extract_strided_slice %508 {offsets = [0, 64], sizes = [2, 32], strides = [1, 1]} : vector<2x128xf32> to vector<2x32xf32>
    %522 = math.tanh %521 : vector<2x32xf32>
    %523 = vector.extract_strided_slice %508 {offsets = [0, 96], sizes = [2, 32], strides = [1, 1]} : vector<2x128xf32> to vector<2x32xf32>
    %524 = arith.negf %523 : vector<2x32xf32>
    %525 = math.exp %524 : vector<2x32xf32>
    %cst_98 = arith.constant 1.000000e+00 : f32
    %526 = vector.broadcast %cst_98 : f32 to vector<2x32xf32>
    %527 = arith.addf %526, %525 : vector<2x32xf32>
    %528 = arith.divf %526, %527 : vector<2x32xf32>
    %529 = arith.mulf %520, %472 : vector<2x32xf32>
    %530 = arith.mulf %514, %522 : vector<2x32xf32>
    %531 = arith.addf %529, %530 : vector<2x32xf32>
    %532 = math.tanh %531 : vector<2x32xf32>
    %533 = arith.mulf %528, %532 : vector<2x32xf32>
    %534 = tpu.concatenate %507, %533 in 1 : vector<2x32xf32>, vector<2x32xf32> -> vector<2x64xf32>
    %535 = arith.truncf %534 : vector<2x64xf32> to vector<2x64xbf16>
    %c0_99 = arith.constant 0 : index
    %c0_100 = arith.constant 0 : index
    %536 = vector.load %arg12[%c0_99, %c0_100] : memref<64x16xbf16, #tpu.memory_space<vmem>>, vector<64x16xbf16>
    %cst_101 = arith.constant dense<0.000000e+00> : vector<2x16xf32>
    %537 = tpu.matmul %535, %536, %cst_101 {dimension_numbers = #tpu.dot_dimension_numbers<[1], [0], [0], [1], [0, 0, 1, 1], [], []>} : vector<2x64xbf16>, vector<64x16xbf16>, vector<2x16xf32> -> vector<2x16xf32>
    %c0_102 = arith.constant 0 : index
    %c0_103 = arith.constant 0 : index
    %538 = vector.load %arg13[%c0_102, %c0_103] : memref<1x16xf32, #tpu.memory_space<vmem>>, vector<1x16xf32>
    %539 = vector.broadcast %538 : vector<1x16xf32> to vector<2x16xf32>
    %540 = arith.addf %537, %539 : vector<2x16xf32>
    %541 = vector.extract_strided_slice %540 {offsets = [0, 0], sizes = [2, 8], strides = [1, 1]} : vector<2x16xf32> to vector<2x8xf32>
    %c0_104 = arith.constant 0 : index
    %c0_105 = arith.constant 0 : index
    %542 = vector.load %arg14[%c0_104, %c0_105] : memref<2x8xf32, #tpu.memory_space<vmem>>, vector<2x8xf32>
    tpu.vector_store %arg14[%c0_104, %c0_105], %541 {strides = array<i32>} : memref<2x8xf32, #tpu.memory_space<vmem>>, vector<2x8xf32>,
    %543 = vector.extract_strided_slice %540 {offsets = [0, 8], sizes = [2, 8], strides = [1, 1]} : vector<2x16xf32> to vector<2x8xf32>
    %c0_106 = arith.constant 0 : index
    %c0_107 = arith.constant 0 : index
    %544 = vector.load %arg15[%c0_106, %c0_107] : memref<2x8xf32, #tpu.memory_space<vmem>>, vector<2x8xf32>
    tpu.vector_store %arg15[%c0_106, %c0_107], %543 {strides = array<i32>} : memref<2x8xf32, #tpu.memory_space<vmem>>, vector<2x8xf32>,
    return
  }
}

</mosaic_0001>

<llo_original>
// kernel: encoder_forward.1
$region0: #{encoder_forward.1}
  #allocation0 [shape = 'u32[]', space=smem, size = 0x4, offset = 0x4, fixed_abs, tag = 'smem constant byte address 0x4 - core index']
  #allocation1 [shape = 'u32[144,128]{1,0:T(1,128)}', space=vmem, size = 0x12000, scoped, tag = 'internal scratch']
  %s0 = inlined_call_operand.vmem [shape: s32[16], index: 0, kind: input, shape index: {}]
  %s1 = inlined_call_operand.vmem [shape: f32[2,8], index: 1, kind: input, shape index: {}]
  %s2 = inlined_call_operand.vmem [shape: f32[50,16], index: 2, kind: input, shape index: {}]
  %s3 = inlined_call_operand.hbm [shape: bf16[48,256], index: 3, kind: input, shape index: {}]
  %s4 = inlined_call_operand.hbm [shape: bf16[64,256], index: 4, kind: input, shape index: {}]
  %s5 = inlined_call_operand.vmem [shape: f32[1,256], index: 5, kind: input, shape index: {}]
  %s6 = inlined_call_operand.hbm [shape: bf16[128,256], index: 6, kind: input, shape index: {}]
  %s7 = inlined_call_operand.hbm [shape: bf16[64,256], index: 7, kind: input, shape index: {}]
  %s8 = inlined_call_operand.hbm [shape: f32[1,256], index: 8, kind: input, shape index: {}]
  %s9 = inlined_call_operand.vmem [shape: bf16[128,256], index: 9, kind: input, shape index: {}]
  %s10 = inlined_call_operand.hbm [shape: bf16[64,256], index: 10, kind: input, shape index: {}]
  %s11 = inlined_call_operand.hbm [shape: f32[1,256], index: 11, kind: input, shape index: {}]
  %s12 = inlined_call_operand.vmem [shape: bf16[64,16], index: 12, kind: input, shape index: {}]
  %s13 = inlined_call_operand.vmem [shape: f32[1,16], index: 13, kind: input, shape index: {}]
  %s14 = inlined_call_operand.hbm [shape: f32[2,8], index: 14, kind: output, shape index: {0}]
  %s15 = inlined_call_operand.hbm [shape: f32[2,8], index: 15, kind: output, shape index: {1}]
  %16 = xla_tuple %s14, %s15
  %s17 = sld [smem:[#allocation0]]
  $region106: #{encoder_forward.1} parent=0
    _
  %s19 = ssub.s32 1, %s17
  %s20 = scalar_select 0, %s19, %s17
  $region1: #{encoder_forward.1} parent=0
    #allocation2 [shape = 'u8[512]{0}', space=smem, size = 0x200, scoped, tag = 'input window, operand 0, single buffered']
    #allocation3 [shape = 's32[1]{0}', space=sflag, size = 0x4, scoped, tag = 'scoped memory for encoder_forward.1']
    #allocation4 [shape = 's32[1]{0}', space=sflag, size = 0x4, scoped, tag = 'scoped memory for encoder_forward.1']
    #allocation5 [shape = 's32[1]{0}', space=sflag, size = 0x4, scoped, tag = 'scoped memory for encoder_forward.1']
    #allocation6 [shape = 'u8[24576]{0}', space=vmem, size = 0x6000, scoped, tag = 'input window, operand 3, single buffered']
    #allocation7 [shape = 'u8[32768]{0}', space=vmem, size = 0x8000, scoped, tag = 'input window, operand 4, single buffered']
    #allocation8 [shape = 's32[1]{0}', space=sflag, size = 0x4, scoped, tag = 'scoped memory for encoder_forward.1']
    #allocation9 [shape = 'u8[65536]{0}', space=vmem, size = 0x10000, scoped, tag = 'input window, operand 6, single buffered']
    #allocation10 [shape = 'u8[32768]{0}', space=vmem, size = 0x8000, scoped, tag = 'input window, operand 7, single buffered']
    #allocation11 [shape = 's32[1]{0}', space=sflag, size = 0x4, scoped, tag = 'scoped memory for encoder_forward.1']
    #allocation12 [shape = 'u8[1024]{0}', space=vmem, size = 0x400, scoped, tag = 'input window, operand 8, single buffered']
    #allocation13 [shape = 'u8[32768]{0}', space=vmem, size = 0x8000, scoped, tag = 'input window, operand 10, single buffered']
    #allocation14 [shape = 's32[1]{0}', space=sflag, size = 0x4, scoped, tag = 'scoped memory for encoder_forward.1']
    #allocation15 [shape = 'u8[1024]{0}', space=vmem, size = 0x400, scoped, tag = 'input window, operand 11, single buffered']
    #allocation16 [shape = 'u8[1024]{0}', space=vmem, size = 0x400, scoped, tag = 'output window, operand 0, single buffered']
    #allocation17 [shape = 'u8[1024]{0}', space=vmem, size = 0x400, scoped, tag = 'output window, operand 1, single buffered']
    #allocation18 [shape = 's32[1]{0}', space=sflag, size = 0x4, scoped, tag = 'scoped memory for encoder_forward.1']
    %21 = vsyncpa [#allocation5], 0
    %22 = vsyncpa [#allocation3], 0
    %23 = vsyncpa [#allocation8], 0
    %24 = vsyncpa [#allocation11], 0
    %25 = vsyncpa [#allocation14], 0
    %26 = vsyncpa [#allocation4], 0
    %27 = vsyncpa [#allocation18], 0
    // Predicated region
    $region2: #{encoder_forward.1} parent=1 // pred_check
      _
    $region3: #{encoder_forward.1} parent=1 // pred_check_branch
      %29 = sbr.rel (0) target = $region5
    $region4: #{encoder_forward.1} parent=1 // pred_region
      %s31 = ssub.s32 16, 16
      %32 = vsyncadd [#allocation5], %s31
      %s34 = sshll.u32 %s0, 4
      %s35 = int_to_ptr.vmem [resolvable:$true] %s34
      %37 = dma.vmem_to_smem %s35, 16, [#allocation2], [#allocation5]
    $region5: #{encoder_forward.1} parent=1 // pred_fallthru
      _
    // Predicated region
    $region6: #{encoder_forward.1} parent=1 // pred_check
      _
    $region7: #{encoder_forward.1} parent=1 // pred_check_branch
      %39 = sbr.rel (0) target = $region9
    $region8: #{encoder_forward.1} parent=1 // pred_region
      _
    $region9: #{encoder_forward.1} parent=1 // pred_fallthru
      _
    // Predicated region
    $region10: #{encoder_forward.1} parent=1 // pred_check
      _
    $region11: #{encoder_forward.1} parent=1 // pred_check_branch
      %41 = sbr.rel (0) target = $region13
    $region12: #{encoder_forward.1} parent=1 // pred_region
      _
    $region13: #{encoder_forward.1} parent=1 // pred_fallthru
      _
    // Predicated region
    $region14: #{encoder_forward.1} parent=1 // pred_check
      _
    $region15: #{encoder_forward.1} parent=1 // pred_check_branch
      %43 = sbr.rel (0) target = $region17
    $region16: #{encoder_forward.1} parent=1 // pred_region
      %s45 = ssub.s32 768, 768
      %46 = vsyncadd [#allocation3], %s45
      %s47 = sshll.u32 [#allocation6], 4
      %s48 = int_to_ptr.vmem [resolvable:$true] %s47
      %53 = dma.hbm_to_vmem [thread:$0]  %s3, 768, %s48, [#allocation3], 128, 128, 8
    $region17: #{encoder_forward.1} parent=1 // pred_fallthru
      _
    // Predicated region
    $region18: #{encoder_forward.1} parent=1 // pred_check
      _
    $region19: #{encoder_forward.1} parent=1 // pred_check_branch
      %55 = sbr.rel (0) target = $region21
    $region20: #{encoder_forward.1} parent=1 // pred_region
      %s57 = ssub.s32 1024, 1024
      %58 = vsyncadd [#allocation8], %s57
      %s59 = sshll.u32 [#allocation7], 4
      %s60 = int_to_ptr.vmem [resolvable:$true] %s59
      %65 = dma.hbm_to_vmem [thread:$0]  %s4, 1024, %s60, [#allocation8], 128, 128, 8
    $region21: #{encoder_forward.1} parent=1 // pred_fallthru
      _
    // Predicated region
    $region22: #{encoder_forward.1} parent=1 // pred_check
      _
    $region23: #{encoder_forward.1} parent=1 // pred_check_branch
      %67 = sbr.rel (0) target = $region25
    $region24: #{encoder_forward.1} parent=1 // pred_region
      _
    $region25: #{encoder_forward.1} parent=1 // pred_fallthru
      _
    // Predicated region
    $region26: #{encoder_forward.1} parent=1 // pred_check
      _
    $region27: #{encoder_forward.1} parent=1 // pred_check_branch
      %69 = sbr.rel (0) target = $region29
    $region28: #{encoder_forward.1} parent=1 // pred_region
      %s71 = ssub.s32 2048, 2048
      %72 = vsyncadd [#allocation8], %s71
      %s73 = sshll.u32 [#allocation9], 4
      %s74 = int_to_ptr.vmem [resolvable:$true] %s73
      %79 = dma.hbm_to_vmem [thread:$0]  %s6, 2048, %s74, [#allocation8], 128, 128, 8
    $region29: #{encoder_forward.1} parent=1 // pred_fallthru
      _
    // Predicated region
    $region30: #{encoder_forward.1} parent=1 // pred_check
      _
    $region31: #{encoder_forward.1} parent=1 // pred_check_branch
      %81 = sbr.rel (0) target = $region33
    $region32: #{encoder_forward.1} parent=1 // pred_region
      %s83 = ssub.s32 1024, 1024
      %84 = vsyncadd [#allocation11], %s83
      %s85 = sshll.u32 [#allocation10], 4
      %s86 = int_to_ptr.vmem [resolvable:$true] %s85
      %91 = dma.hbm_to_vmem [thread:$0]  %s7, 1024, %s86, [#allocation11], 128, 128, 8
    $region33: #{encoder_forward.1} parent=1 // pred_fallthru
      _
    // Predicated region
    $region34: #{encoder_forward.1} parent=1 // pred_check
      _
    $region35: #{encoder_forward.1} parent=1 // pred_check_branch
      %93 = sbr.rel (0) target = $region37
    $region36: #{encoder_forward.1} parent=1 // pred_region
      %s95 = ssub.s32 32, 32
      %96 = vsyncadd [#allocation11], %s95
      %s98 = sshll.u32 [#allocation12], 4
      %s99 = int_to_ptr.vmem [resolvable:$true] %s98
      %101 = dma.hbm_to_vmem [thread:$0]  %s8, 32, %s99, [#allocation11]
    $region37: #{encoder_forward.1} parent=1 // pred_fallthru
      _
    // Predicated region
    $region38: #{encoder_forward.1} parent=1 // pred_check
      _
    $region39: #{encoder_forward.1} parent=1 // pred_check_branch
      %103 = sbr.rel (0) target = $region41
    $region40: #{encoder_forward.1} parent=1 // pred_region
      _
    $region41: #{encoder_forward.1} parent=1 // pred_fallthru
      _
    // Predicated region
    $region42: #{encoder_forward.1} parent=1 // pred_check
      _
    $region43: #{encoder_forward.1} parent=1 // pred_check_branch
      %105 = sbr.rel (0) target = $region45
    $region44: #{encoder_forward.1} parent=1 // pred_region
      %s107 = ssub.s32 1024, 1024
      %108 = vsyncadd [#allocation14], %s107
      %s109 = sshll.u32 [#allocation13], 4
      %s110 = int_to_ptr.vmem [resolvable:$true] %s109
      %115 = dma.hbm_to_vmem [thread:$0]  %s10, 1024, %s110, [#allocation14], 128, 128, 8
    $region45: #{encoder_forward.1} parent=1 // pred_fallthru
      _
    // Predicated region
    $region46: #{encoder_forward.1} parent=1 // pred_check
      _
    $region47: #{encoder_forward.1} parent=1 // pred_check_branch
      %117 = sbr.rel (0) target = $region49
    $region48: #{encoder_forward.1} parent=1 // pred_region
      %s119 = ssub.s32 32, 32
      %120 = vsyncadd [#allocation14], %s119
      %s122 = sshll.u32 [#allocation15], 4
      %s123 = int_to_ptr.vmem [resolvable:$true] %s122
      %125 = dma.hbm_to_vmem [thread:$0]  %s11, 32, %s123, [#allocation14]
    $region49: #{encoder_forward.1} parent=1 // pred_fallthru
      _
    // Predicated region
    $region50: #{encoder_forward.1} parent=1 // pred_check
      _
    $region51: #{encoder_forward.1} parent=1 // pred_check_branch
      %127 = sbr.rel (0) target = $region53
    $region52: #{encoder_forward.1} parent=1 // pred_region
      _
    $region53: #{encoder_forward.1} parent=1 // pred_fallthru
      _
    // Predicated region
    $region54: #{encoder_forward.1} parent=1 // pred_check
      _
    $region55: #{encoder_forward.1} parent=1 // pred_check_branch
      %129 = sbr.rel (0) target = $region57
    $region56: #{encoder_forward.1} parent=1 // pred_region
      _
    $region57: #{encoder_forward.1} parent=1 // pred_fallthru
      _
    // Predicated region
    $region58: #{encoder_forward.1} parent=1 // pred_check
      _
    $region59: #{encoder_forward.1} parent=1 // pred_check_branch
      %131 = sbr.rel (0) target = $region61
    $region60: #{encoder_forward.1} parent=1 // pred_region
      %132 = dma.done [#allocation5], 16
    $region61: #{encoder_forward.1} parent=1 // pred_fallthru
      _
    // Predicated region
    $region62: #{encoder_forward.1} parent=1 // pred_check
      _
    $region63: #{encoder_forward.1} parent=1 // pred_check_branch
      %134 = sbr.rel (0) target = $region65
    $region64: #{encoder_forward.1} parent=1 // pred_region
      %135 = dma.done [#allocation3], 768
    $region65: #{encoder_forward.1} parent=1 // pred_fallthru
      _
    // Predicated region
    $region66: #{encoder_forward.1} parent=1 // pred_check
      _
    $region67: #{encoder_forward.1} parent=1 // pred_check_branch
      %137 = sbr.rel (0) target = $region69
    $region68: #{encoder_forward.1} parent=1 // pred_region
      %138 = dma.done [#allocation8], 1024
    $region69: #{encoder_forward.1} parent=1 // pred_fallthru
      _
    // Predicated region
    $region70: #{encoder_forward.1} parent=1 // pred_check
      _
    $region71: #{encoder_forward.1} parent=1 // pred_check_branch
      %140 = sbr.rel (0) target = $region73
    $region72: #{encoder_forward.1} parent=1 // pred_region
      %141 = dma.done [#allocation8], 2048
    $region73: #{encoder_forward.1} parent=1 // pred_fallthru
      _
    // Predicated region
    $region74: #{encoder_forward.1} parent=1 // pred_check
      _
    $region75: #{encoder_forward.1} parent=1 // pred_check_branch
      %143 = sbr.rel (0) target = $region77
    $region76: #{encoder_forward.1} parent=1 // pred_region
      %144 = dma.done [#allocation11], 1024
    $region77: #{encoder_forward.1} parent=1 // pred_fallthru
      _
    // Predicated region
    $region78: #{encoder_forward.1} parent=1 // pred_check
      _
    $region79: #{encoder_forward.1} parent=1 // pred_check_branch
      %146 = sbr.rel (0) target = $region81
    $region80: #{encoder_forward.1} parent=1 // pred_region
      %147 = dma.done [#allocation11], 32
    $region81: #{encoder_forward.1} parent=1 // pred_fallthru
      _
    // Predicated region
    $region82: #{encoder_forward.1} parent=1 // pred_check
      _
    $region83: #{encoder_forward.1} parent=1 // pred_check_branch
      %149 = sbr.rel (0) target = $region85
    $region84: #{encoder_forward.1} parent=1 // pred_region
      %150 = dma.done [#allocation14], 1024
    $region85: #{encoder_forward.1} parent=1 // pred_fallthru
      _
    // Predicated region
    $region86: #{encoder_forward.1} parent=1 // pred_check
      _
    $region87: #{encoder_forward.1} parent=1 // pred_check_branch
      %152 = sbr.rel (0) target = $region89
    $region88: #{encoder_forward.1} parent=1 // pred_region
      %153 = dma.done [#allocation14], 32
    $region89: #{encoder_forward.1} parent=1 // pred_fallthru
      _
    %154 = sfence
    %s156 = sld [smem:[#allocation2]]
    %s157 = scalar_lea.vmem %s2, %s156
    %v158 = vld [vmem:[%s157] sm:$0x1]
    %s159 = sld [smem:[#allocation2 + $0x8]]
    %s160 = scalar_lea.vmem %s2, %s159
    %v161 = vld [vmem:[%s160] sm:$0x1]
    %s162 = sld [smem:[#allocation2 + $0x1]]
    %s163 = scalar_lea.vmem %s2, %s162
    %v164 = vld [vmem:[%s163] sm:$0x1]
    %s165 = sld [smem:[#allocation2 + $0x9]]
    %s166 = scalar_lea.vmem %s2, %s165
    %v167 = vld [vmem:[%s166] sm:$0x1]
    %s168 = sld [smem:[#allocation2 + $0x2]]
    %s169 = scalar_lea.vmem %s2, %s168
    %v170 = vld [vmem:[%s169] sm:$0x1]
    %s171 = sld [smem:[#allocation2 + $0xa]]
    %s172 = scalar_lea.vmem %s2, %s171
    %v173 = vld [vmem:[%s172] sm:$0x1]
    %s174 = sld [smem:[#allocation2 + $0x3]]
    %s175 = scalar_lea.vmem %s2, %s174
    %v176 = vld [vmem:[%s175] sm:$0x1]
    %s177 = sld [smem:[#allocation2 + $0xb]]
    %s178 = scalar_lea.vmem %s2, %s177
    %v179 = vld [vmem:[%s178] sm:$0x1]
    %s180 = sld [smem:[#allocation2 + $0x4]]
    %s181 = scalar_lea.vmem %s2, %s180
    %v182 = vld [vmem:[%s181] sm:$0x1]
    %s183 = sld [smem:[#allocation2 + $0xc]]
    %s184 = scalar_lea.vmem %s2, %s183
    %v185 = vld [vmem:[%s184] sm:$0x1]
    %s186 = sld [smem:[#allocation2 + $0x5]]
    %s187 = scalar_lea.vmem %s2, %s186
    %v188 = vld [vmem:[%s187] sm:$0x1]
    %s189 = sld [smem:[#allocation2 + $0xd]]
    %s190 = scalar_lea.vmem %s2, %s189
    %v191 = vld [vmem:[%s190] sm:$0x1]
    %s192 = sld [smem:[#allocation2 + $0x6]]
    %s193 = scalar_lea.vmem %s2, %s192
    %v194 = vld [vmem:[%s193] sm:$0x1]
    %s195 = sld [smem:[#allocation2 + $0xe]]
    %s196 = scalar_lea.vmem %s2, %s195
    %v197 = vld [vmem:[%s196] sm:$0x1]
    %s198 = sld [smem:[#allocation2 + $0x7]]
    %s199 = scalar_lea.vmem %s2, %s198
    %v200 = vld [vmem:[%s199] sm:$0x1]
    %s201 = sld [smem:[#allocation2 + $0xf]]
    %s202 = scalar_lea.vmem %s2, %s201
    %v203 = vld [vmem:[%s202] sm:$0x1]
    %v205 = vrot.slane %v161, 7
    %v208 = vrot.slane %v164, 6
    %v211 = vrot.slane %v167, 5
    %v214 = vrot.slane %v170, 4
    %v217 = vrot.slane %v173, 3
    %v220 = vrot.slane %v176, 2
    %v223 = vrot.slane %v179, 1
    %v226 = vrot.slane %v185, 7
    %v229 = vrot.slane %v188, 6
    %v232 = vrot.slane %v191, 5
    %v235 = vrot.slane %v194, 4
    %v238 = vrot.slane %v197, 3
    %v241 = vrot.slane %v200, 2
    %v244 = vrot.slane %v203, 1
    %vm246 = vcmask 1040384
    %v247 = vsel %vm246, %v158, %v205
    %vm248 = vcmask 1041408
    %v249 = vsel %vm248, %v247, %v208
    %vm250 = vcmask 1042432
    %v251 = vsel %vm250, %v249, %v211
    %vm252 = vcmask 1043456
    %v253 = vsel %vm252, %v251, %v214
    %vm254 = vcmask 1044480
    %v255 = vsel %vm254, %v253, %v217
    %vm256 = vcmask 1045504
    %v257 = vsel %vm256, %v255, %v220
    %vm258 = vcmask 1046528
    %v259 = vsel %vm258, %v257, %v223
    %v260 = vsel %vm246, %v182, %v226
    %v261 = vsel %vm248, %v260, %v229
    %v262 = vsel %vm250, %v261, %v232
    %v263 = vsel %vm252, %v262, %v235
    %v264 = vsel %vm254, %v263, %v238
    %v265 = vsel %vm256, %v264, %v241
    %v266 = vsel %vm258, %v265, %v244
    %v269 = vcombine.high %v259, %v259
    %v271 = vunpack.c.l.s4 1983009808
    %v272 = vunpack.c.0.s8 %v271
    %v273 = vlaneseq
    %v274 = vshrl.u32 %v273, 7
    %v275 = vsub.s32 %v272, %v274
    %v276 = vrot.slane %v259, %v275
    %v278 = vunpack.c.l.s4 1983009808
    %v279 = vunpack.c.0.s8 %v278
    %v280 = vlaneseq
    %v281 = vshrl.u32 %v280, 7
    %v282 = vsub.s32 %v279, %v281
    %v283 = vrot.slane %v269, %v282
    %v284 = vcombine.high %v276, %v276
    %v285 = vcombine.high %v283, %v283
    %v286 = vcombine.high %v266, %v266
    %v288 = vunpack.c.l.s4 1983009808
    %v289 = vunpack.c.0.s8 %v288
    %v290 = vlaneseq
    %v291 = vshrl.u32 %v290, 7
    %v292 = vsub.s32 %v289, %v291
    %v293 = vrot.slane %v266, %v292
    %v295 = vunpack.c.l.s4 1983009808
    %v296 = vunpack.c.0.s8 %v295
    %v297 = vlaneseq
    %v298 = vshrl.u32 %v297, 7
    %v299 = vsub.s32 %v296, %v298
    %v300 = vrot.slane %v286, %v299
    %v301 = vcombine.high %v293, %v293
    %v302 = vcombine.high %v300, %v300
    %v311 = vld [vmem:[%s1] sm:$0x3]
    %313 = vrot.lane.b32.xlu0 %v311, 16
    %v314 = vpop.permute.xlu0 %313
    %vm316 = vcmask 130048
    %v317 = vsel %vm316, %v276, %v314
    %v318 = vsel %vm316, %v284, %v314
    %v319 = vsel %vm316, %v283, %v314
    %v320 = vsel %vm316, %v285, %v314
    %v321 = vsel %vm316, %v293, %v314
    %v322 = vsel %vm316, %v301, %v314
    %v323 = vsel %vm316, %v300, %v314
    %v324 = vsel %vm316, %v302, %v314
    %329 = vrot.lane.b32.xlu0 %v318, 24
    %v330 = vpop.permute.xlu0 %329
    %331 = vrot.lane.b32.xlu0 %v320, 24
    %v332 = vpop.permute.xlu0 %331
    %333 = vrot.lane.b32.xlu0 %v322, 24
    %v334 = vpop.permute.xlu0 %333
    %335 = vrot.lane.b32.xlu0 %v324, 24
    %v336 = vpop.permute.xlu0 %335
    %vm341 = vcmask 195584
    %v342 = vsel %vm341, %v317, %v330
    %v343 = vsel %vm341, %v319, %v332
    %v344 = vsel %vm341, %v321, %v334
    %v345 = vsel %vm341, %v323, %v336
    %v346 = vld [vmem:[#allocation6] sm:$0xff]
    %v347 = vld [vmem:[#allocation6 + $0x8] sm:$0xff]
    %v348 = vld [vmem:[#allocation6 + $0x10] sm:$0xff]
    %v349 = vld [vmem:[#allocation6 + $0x18] sm:$0xff]
    %v350 = vld [vmem:[#allocation6 + $0x20] sm:$0xff]
    %v351 = vld [vmem:[#allocation6 + $0x28] sm:$0xff]
    %v352 = vld [vmem:[#allocation7] sm:$0xff]
    %v353 = vld [vmem:[#allocation7 + $0x8] sm:$0xff]
    %v354 = vld [vmem:[#allocation7 + $0x10] sm:$0xff]
    %v355 = vld [vmem:[#allocation7 + $0x18] sm:$0xff]
    %v356 = vld [vmem:[#allocation7 + $0x20] sm:$0xff]
    %v357 = vld [vmem:[#allocation7 + $0x28] sm:$0xff]
    %v358 = vld [vmem:[#allocation7 + $0x30] sm:$0xff]
    %v359 = vld [vmem:[#allocation7 + $0x38] sm:$0xff]
    %v360 = vld [vmem:[%s5] sm:$0x3]
    %v365 = vcombine.low %v342, %v343
    %v366 = vcombine.low %v344, %v345
    %v368 = vunpack.c.l.s4 1983009808
    %v369 = vunpack.c.0.s8 %v368
    %v370 = vlaneseq
    %v371 = vshrl.u32 %v370, 7
    %v372 = vsub.s32 %v369, %v371
    %v373 = vrot.slane %v365, %v372
    %v375 = vunpack.c.l.s4 1983009808
    %v376 = vunpack.c.0.s8 %v375
    %v377 = vlaneseq
    %v378 = vshrl.u32 %v377, 7
    %v379 = vsub.s32 %v376, %v378
    %v380 = vrot.slane %v366, %v379
    %v381 = vcombine.low %v373, %v380
    %v383 = vpack.c.bf16 %v381, %v381
    %v385 = vlaneseq
    %v386 = vshrl.u32 %v385, 7
    %v387 = vsub.s32 0, %v386
    %v388 = vrot.slane %v360, %v387
    %v389 = vlaneseq
    %v390 = vshrl.u32 %v389, 7
    %v391 = vsub.s32 1, %v390
    %v392 = vrot.slane %v360, %v391
    %v401 = vunpack.c.l.b16 %v346
    %v402 = vunpack.c.h.b16 %v346
    %v403 = vunpack.c.l.b16 %v347
    %v404 = vunpack.c.h.b16 %v347
    %v405 = vunpack.c.l.b16 %v348
    %v406 = vunpack.c.h.b16 %v348
    %v407 = vunpack.c.l.b16 %v349
    %v408 = vunpack.c.h.b16 %v349
    %v409 = vunpack.c.l.b16 %v350
    %v410 = vunpack.c.h.b16 %v350
    %v411 = vunpack.c.l.b16 %v351
    %v412 = vunpack.c.h.b16 %v351
    %v413 = vpack.c.b16 %v403, %v401
    %v414 = vpack.c.b16 %v404, %v402
    %v415 = vpack.c.b16 %v407, %v405
    %v416 = vpack.c.b16 %v408, %v406
    %v417 = vpack.c.b16 %v411, %v409
    %v418 = vpack.c.b16 %v412, %v410
    %vm425 = vcmask 392192
    %v427 = vsel %vm425, %v383, 0
    %429 = vmatprep.subr.bf16.mxu0 0
    %430 = vmatpush1.bf16.msra.mxu0 0
    %431 = vmatprep.subr.bf16.mxu0 0
    %432 = vmatpush1.bf16.msra.mxu0 0
    %433 = vmatprep.subr.bf16.mxu0 0
    %434 = vmatpush1.bf16.msra.mxu0 0
    %435 = vmatprep.subr.bf16.mxu0 0
    %436 = vmatpush1.bf16.msra.mxu0 0
    %437 = vmatprep.subr.bf16.mxu0 0
    %438 = vmatpush1.bf16.msra.mxu0 0
    %439 = vmatprep.subr.bf16.mxu0 %v418
    %440 = vmatpush1.bf16.msra.mxu0 %v417
    %441 = vmatprep.subr.bf16.mxu0 %v416
    %442 = vmatpush1.bf16.msra.mxu0 %v415
    %443 = vmatprep.subr.bf16.mxu0 %v414
    %444 = vmatpush1.bf16.msra.mxu0 %v413
    %445 = vmatprep.subr.bf16.mxu0 0
    %446 = vmatpush2.bf16.msra.mxu0 0
    %447 = vmatprep.subr.bf16.mxu0 0
    %448 = vmatpush2.bf16.msra.mxu0 0
    %449 = vmatprep.subr.bf16.mxu0 0
    %450 = vmatpush2.bf16.msra.mxu0 0
    %451 = vmatprep.subr.bf16.mxu0 0
    %452 = vmatpush2.bf16.msra.mxu0 0
    %453 = vmatprep.subr.bf16.mxu0 0
    %454 = vmatpush2.bf16.msra.mxu0 0
    %455 = vmatprep.subr.bf16.mxu0 0
    %456 = vmatpush2.bf16.msra.mxu0 0
    %457 = vmatprep.subr.bf16.mxu0 0
    %458 = vmatpush2.bf16.msra.mxu0 0
    %459 = vmatprep.subr.bf16.mxu0 0
    %460 = vmatpush2.bf16.msra.mxu0 0
    %461 = vmatprep.mubr.bf16.mxu0 0
    %462 = vmatmul.mubr.bf16.gmra.mxu0 %v427
    %v463 = vpop.f32.mrf.mxu0
    %v464 = vadd.f32 %v388, %v463
    %v465 = vpop.f32.mrf.mxu0
    %v466 = vadd.f32 %v392, %v465
    %v467 = vpop.f32.mrf.mxu0
    %v468 = vpop.f32.mrf.mxu0
    %469 = vdwg.mxu0
    %v472 = vcombine.low %v464, %v466
    %v473 = vcombine.high %v464, %v466
    %v475 = vunpack.c.l.s4 1983009808
    %v476 = vunpack.c.0.s8 %v475
    %v477 = vlaneseq
    %v478 = vshrl.u32 %v477, 7
    %v479 = vsub.s32 %v476, %v478
    %v480 = vrot.slane %v472, %v479
    %v482 = vunpack.c.l.s4 1983009808
    %v483 = vunpack.c.0.s8 %v482
    %v484 = vlaneseq
    %v485 = vshrl.u32 %v484, 7
    %v486 = vsub.s32 %v483, %v485
    %v487 = vrot.slane %v473, %v486
    %v488 = vcombine.high %v480, %v480
    %v489 = vcombine.high %v487, %v487
    %v494 = vrot.slane %v489, 2
    %v496 = vpack.c.bf16 0.0, 0.0
    %v505 = vunpack.c.l.b16 %v352
    %v506 = vunpack.c.h.b16 %v352
    %v507 = vunpack.c.l.b16 %v353
    %v508 = vunpack.c.h.b16 %v353
    %v509 = vunpack.c.l.b16 %v354
    %v510 = vunpack.c.h.b16 %v354
    %v511 = vunpack.c.l.b16 %v355
    %v512 = vunpack.c.h.b16 %v355
    %v513 = vunpack.c.l.b16 %v356
    %v514 = vunpack.c.h.b16 %v356
    %v515 = vunpack.c.l.b16 %v357
    %v516 = vunpack.c.h.b16 %v357
    %v517 = vunpack.c.l.b16 %v358
    %v518 = vunpack.c.h.b16 %v358
    %v519 = vunpack.c.l.b16 %v359
    %v520 = vunpack.c.h.b16 %v359
    %v521 = vpack.c.b16 %v507, %v505
    %v522 = vpack.c.b16 %v508, %v506
    %v523 = vpack.c.b16 %v511, %v509
    %v524 = vpack.c.b16 %v512, %v510
    %v525 = vpack.c.b16 %v515, %v513
    %v526 = vpack.c.b16 %v516, %v514
    %v527 = vpack.c.b16 %v519, %v517
    %v528 = vpack.c.b16 %v520, %v518
    %vm537 = vcmask 523264
    %v539 = vsel %vm537, %v496, 0
    %541 = vmatprep.subr.bf16.mxu0 0
    %542 = vmatpush1.bf16.msra.mxu0 0
    %543 = vmatprep.subr.bf16.mxu0 0
    %544 = vmatpush1.bf16.msra.mxu0 0
    %545 = vmatprep.subr.bf16.mxu0 0
    %546 = vmatpush1.bf16.msra.mxu0 0
    %547 = vmatprep.subr.bf16.mxu0 0
    %548 = vmatpush1.bf16.msra.mxu0 0
    %549 = vmatprep.subr.bf16.mxu0 %v528
    %550 = vmatpush1.bf16.msra.mxu0 %v527
    %551 = vmatprep.subr.bf16.mxu0 %v526
    %552 = vmatpush1.bf16.msra.mxu0 %v525
    %553 = vmatprep.subr.bf16.mxu0 %v524
    %554 = vmatpush1.bf16.msra.mxu0 %v523
    %555 = vmatprep.subr.bf16.mxu0 %v522
    %556 = vmatpush1.bf16.msra.mxu0 %v521
    %557 = vmatprep.subr.bf16.mxu0 0
    %558 = vmatpush2.bf16.msra.mxu0 0
    %559 = vmatprep.subr.bf16.mxu0 0
    %560 = vmatpush2.bf16.msra.mxu0 0
    %561 = vmatprep.subr.bf16.mxu0 0
    %562 = vmatpush2.bf16.msra.mxu0 0
    %563 = vmatprep.subr.bf16.mxu0 0
    %564 = vmatpush2.bf16.msra.mxu0 0
    %565 = vmatprep.subr.bf16.mxu0 0
    %566 = vmatpush2.bf16.msra.mxu0 0
    %567 = vmatprep.subr.bf16.mxu0 0
    %568 = vmatpush2.bf16.msra.mxu0 0
    %569 = vmatprep.subr.bf16.mxu0 0
    %570 = vmatpush2.bf16.msra.mxu0 0
    %571 = vmatprep.subr.bf16.mxu0 0
    %572 = vmatpush2.bf16.msra.mxu0 0
    %573 = vmatprep.mubr.bf16.mxu0 0
    %574 = vmatmul.mubr.bf16.gmra.mxu0 %v539
    %v575 = vpop.f32.mrf.mxu0
    %v576 = vadd.f32 0.0, %v575
    %v577 = vpop.f32.mrf.mxu0
    %v578 = vadd.f32 0.0, %v577
    %v579 = vpop.f32.mrf.mxu0
    %v580 = vpop.f32.mrf.mxu0
    %581 = vdwg.mxu0
    %v582 = vadd.f32 %v480, %v576
    %v583 = vadd.f32 %v494, %v578
    %v584 = vxor.u32 %v582, 2147483648
    %v585 = vmul.f32 %v584, 1.442695
    %v586 = vpow.pop %v585
    %v587 = vadd.f32 %v586, 1.0
    %v588 = vrcp.pop %v587
    %v589 = vmul.f32 1.0, %v588
    %v590 = vtanh.pop %v582
    %v591 = vmul.f32 %v589, 0.0
    %593 = vrot.lane.b32.xlu0 %v590, 64
    %v594 = vpop.permute.xlu0 %593
    %v596 = vmul.f32 %v589, %v594
    %598 = vrot.lane.b32.xlu0 %v596, 32
    %v599 = vpop.permute.xlu0 %598
    %v601 = vadd.f32 %v591, %v599
    %v602 = vtanh.pop %v601
    %604 = vrot.lane.b32.xlu0 %v602, 64
    %v605 = vpop.permute.xlu0 %604
    %v607 = vmul.f32 %v589, %v605
    %v608 = vxor.u32 %v583, 2147483648
    %v609 = vmul.f32 %v608, 1.442695
    %v610 = vpow.pop %v609
    %v611 = vadd.f32 %v610, 1.0
    %v612 = vrcp.pop %v611
    %v613 = vmul.f32 1.0, %v612
    %v614 = vtanh.pop %v583
    %v615 = vmul.f32 %v613, 0.0
    %617 = vrot.lane.b32.xlu0 %v614, 64
    %v618 = vpop.permute.xlu0 %617
    %v620 = vmul.f32 %v613, %v618
    %622 = vrot.lane.b32.xlu0 %v620, 32
    %v623 = vpop.permute.xlu0 %622
    %v625 = vadd.f32 %v615, %v623
    %v626 = vtanh.pop %v625
    %628 = vrot.lane.b32.xlu0 %v626, 64
    %v629 = vpop.permute.xlu0 %628
    %v631 = vmul.f32 %v613, %v629
    %v632 = vrot.slane %v487, 2
    %635 = vrot.lane.b32.xlu0 %v607, 32
    %v636 = vpop.permute.xlu0 %635
    %639 = vrot.lane.b32.xlu0 %v631, 64
    %v640 = vpop.permute.xlu0 %639
    %vm642 = vcmask 261120
    %v643 = vsel %vm642, %v636, %v640
    %v644 = vpack.c.bf16 %v643, %v643
    %v646 = vsel %vm537, %v644, 0
    %648 = vmatprep.subr.bf16.mxu0 0
    %649 = vmatpush1.bf16.msra.mxu0 0
    %650 = vmatprep.subr.bf16.mxu0 0
    %651 = vmatpush1.bf16.msra.mxu0 0
    %652 = vmatprep.subr.bf16.mxu0 0
    %653 = vmatpush1.bf16.msra.mxu0 0
    %654 = vmatprep.subr.bf16.mxu0 0
    %655 = vmatpush1.bf16.msra.mxu0 0
    %656 = vmatprep.subr.bf16.mxu0 %v528
    %657 = vmatpush1.bf16.msra.mxu0 %v527
    %658 = vmatprep.subr.bf16.mxu0 %v526
    %659 = vmatpush1.bf16.msra.mxu0 %v525
    %660 = vmatprep.subr.bf16.mxu0 %v524
    %661 = vmatpush1.bf16.msra.mxu0 %v523
    %662 = vmatprep.subr.bf16.mxu0 %v522
    %663 = vmatpush1.bf16.msra.mxu0 %v521
    %664 = vmatprep.subr.bf16.mxu0 0
    %665 = vmatpush2.bf16.msra.mxu0 0
    %666 = vmatprep.subr.bf16.mxu0 0
    %667 = vmatpush2.bf16.msra.mxu0 0
    %668 = vmatprep.subr.bf16.mxu0 0
    %669 = vmatpush2.bf16.msra.mxu0 0
    %670 = vmatprep.subr.bf16.mxu0 0
    %671 = vmatpush2.bf16.msra.mxu0 0
    %672 = vmatprep.subr.bf16.mxu0 0
    %673 = vmatpush2.bf16.msra.mxu0 0
    %674 = vmatprep.subr.bf16.mxu0 0
    %675 = vmatpush2.bf16.msra.mxu0 0
    %676 = vmatprep.subr.bf16.mxu0 0
    %677 = vmatpush2.bf16.msra.mxu0 0
    %678 = vmatprep.subr.bf16.mxu0 0
    %679 = vmatpush2.bf16.msra.mxu0 0
    %680 = vmatprep.mubr.bf16.mxu0 0
    %681 = vmatmul.mubr.bf16.gmra.mxu0 %v646
    %v682 = vpop.f32.mrf.mxu0
    %v683 = vadd.f32 0.0, %v682
    %v684 = vpop.f32.mrf.mxu0
    %v685 = vadd.f32 0.0, %v684
    %v686 = vpop.f32.mrf.mxu0
    %v687 = vpop.f32.mrf.mxu0
    %688 = vdwg.mxu0
    %v689 = vadd.f32 %v488, %v683
    %v690 = vadd.f32 %v632, %v685
    %v691 = vxor.u32 %v689, 2147483648
    %v692 = vmul.f32 %v691, 1.442695
    %v693 = vpow.pop %v692
    %v694 = vadd.f32 %v693, 1.0
    %v695 = vrcp.pop %v694
    %v696 = vmul.f32 1.0, %v695
    %v697 = vtanh.pop %v689
    %v698 = vmul.f32 %v696, %v601
    %700 = vrot.lane.b32.xlu0 %v697, 64
    %v701 = vpop.permute.xlu0 %700
    %v703 = vmul.f32 %v696, %v701
    %705 = vrot.lane.b32.xlu0 %v703, 32
    %v706 = vpop.permute.xlu0 %705
    %v708 = vadd.f32 %v698, %v706
    %v709 = vtanh.pop %v708
    %711 = vrot.lane.b32.xlu0 %v709, 64
    %v712 = vpop.permute.xlu0 %711
    %v714 = vmul.f32 %v696, %v712
    %v715 = vxor.u32 %v690, 2147483648
    %v716 = vmul.f32 %v715, 1.442695
    %v717 = vpow.pop %v716
    %v718 = vadd.f32 %v717, 1.0
    %v719 = vrcp.pop %v718
    %v720 = vmul.f32 1.0, %v719
    %v721 = vtanh.pop %v690
    %v722 = vmul.f32 %v720, %v625
    %724 = vrot.lane.b32.xlu0 %v721, 64
    %v725 = vpop.permute.xlu0 %724
    %v727 = vmul.f32 %v720, %v725
    %729 = vrot.lane.b32.xlu0 %v727, 32
    %v730 = vpop.permute.xlu0 %729
    %v732 = vadd.f32 %v722, %v730
    %v733 = vtanh.pop %v732
    %735 = vrot.lane.b32.xlu0 %v733, 64
    %v736 = vpop.permute.xlu0 %735
    %v738 = vmul.f32 %v720, %v736
    %v739 = vrot.slane %v488, 2
    %742 = vrot.lane.b32.xlu0 %v714, 32
    %v743 = vpop.permute.xlu0 %742
    %746 = vrot.lane.b32.xlu0 %v738, 64
    %v747 = vpop.permute.xlu0 %746
    %v749 = vsel %vm642, %v743, %v747
    %v750 = vpack.c.bf16 %v749, %v749
    %v752 = vsel %vm537, %v750, 0
    %754 = vmatprep.subr.bf16.mxu0 0
    %755 = vmatpush1.bf16.msra.mxu0 0
    %756 = vmatprep.subr.bf16.mxu0 0
    %757 = vmatpush1.bf16.msra.mxu0 0
    %758 = vmatprep.subr.bf16.mxu0 0
    %759 = vmatpush1.bf16.msra.mxu0 0
    %760 = vmatprep.subr.bf16.mxu0 0
    %761 = vmatpush1.bf16.msra.mxu0 0
    %762 = vmatprep.subr.bf16.mxu0 %v528
    %763 = vmatpush1.bf16.msra.mxu0 %v527
    %764 = vmatprep.subr.bf16.mxu0 %v526
    %765 = vmatpush1.bf16.msra.mxu0 %v525
    %766 = vmatprep.subr.bf16.mxu0 %v524
    %767 = vmatpush1.bf16.msra.mxu0 %v523
    %768 = vmatprep.subr.bf16.mxu0 %v522
    %769 = vmatpush1.bf16.msra.mxu0 %v521
    %770 = vmatprep.subr.bf16.mxu0 0
    %771 = vmatpush2.bf16.msra.mxu0 0
    %772 = vmatprep.subr.bf16.mxu0 0
    %773 = vmatpush2.bf16.msra.mxu0 0
    %774 = vmatprep.subr.bf16.mxu0 0
    %775 = vmatpush2.bf16.msra.mxu0 0
    %776 = vmatprep.subr.bf16.mxu0 0
    %777 = vmatpush2.bf16.msra.mxu0 0
    %778 = vmatprep.subr.bf16.mxu0 0
    %779 = vmatpush2.bf16.msra.mxu0 0
    %780 = vmatprep.subr.bf16.mxu0 0
    %781 = vmatpush2.bf16.msra.mxu0 0
    %782 = vmatprep.subr.bf16.mxu0 0
    %783 = vmatpush2.bf16.msra.mxu0 0
    %784 = vmatprep.subr.bf16.mxu0 0
    %785 = vmatpush2.bf16.msra.mxu0 0
    %786 = vmatprep.mubr.bf16.mxu0 0
    %787 = vmatmul.mubr.bf16.gmra.mxu0 %v752
    %v788 = vpop.f32.mrf.mxu0
    %v789 = vadd.f32 0.0, %v788
    %v790 = vpop.f32.mrf.mxu0
    %v791 = vadd.f32 0.0, %v790
    %v792 = vpop.f32.mrf.mxu0
    %v793 = vpop.f32.mrf.mxu0
    %794 = vdwg.mxu0
    %v795 = vadd.f32 %v487, %v789
    %v796 = vadd.f32 %v739, %v791
    %v797 = vxor.u32 %v795, 2147483648
    %v798 = vmul.f32 %v797, 1.442695
    %v799 = vpow.pop %v798
    %v800 = vadd.f32 %v799, 1.0
    %v801 = vrcp.pop %v800
    %v802 = vmul.f32 1.0, %v801
    %v803 = vtanh.pop %v795
    %v804 = vmul.f32 %v802, %v708
    %806 = vrot.lane.b32.xlu0 %v803, 64
    %v807 = vpop.permute.xlu0 %806
    %v809 = vmul.f32 %v802, %v807
    %811 = vrot.lane.b32.xlu0 %v809, 32
    %v812 = vpop.permute.xlu0 %811
    %v814 = vadd.f32 %v804, %v812
    %v815 = vtanh.pop %v814
    %817 = vrot.lane.b32.xlu0 %v815, 64
    %v818 = vpop.permute.xlu0 %817
    %v820 = vmul.f32 %v802, %v818
    %v821 = vxor.u32 %v796, 2147483648
    %v822 = vmul.f32 %v821, 1.442695
    %v823 = vpow.pop %v822
    %v824 = vadd.f32 %v823, 1.0
    %v825 = vrcp.pop %v824
    %v826 = vmul.f32 1.0, %v825
    %v827 = vtanh.pop %v796
    %v828 = vmul.f32 %v826, %v732
    %830 = vrot.lane.b32.xlu0 %v827, 64
    %v831 = vpop.permute.xlu0 %830
    %v833 = vmul.f32 %v826, %v831
    %835 = vrot.lane.b32.xlu0 %v833, 32
    %v836 = vpop.permute.xlu0 %835
    %v838 = vadd.f32 %v828, %v836
    %v839 = vtanh.pop %v838
    %841 = vrot.lane.b32.xlu0 %v839, 64
    %v842 = vpop.permute.xlu0 %841
    %v844 = vmul.f32 %v826, %v842
    %v845 = vrot.slane %v480, 2
    %848 = vrot.lane.b32.xlu0 %v820, 32
    %v849 = vpop.permute.xlu0 %848
    %852 = vrot.lane.b32.xlu0 %v844, 64
    %v853 = vpop.permute.xlu0 %852
    %v855 = vsel %vm642, %v849, %v853
    %v856 = vpack.c.bf16 %v855, %v855
    %v858 = vsel %vm537, %v856, 0
    %860 = vmatprep.subr.bf16.mxu0 0
    %861 = vmatpush1.bf16.msra.mxu0 0
    %862 = vmatprep.subr.bf16.mxu0 0
    %863 = vmatpush1.bf16.msra.mxu0 0
    %864 = vmatprep.subr.bf16.mxu0 0
    %865 = vmatpush1.bf16.msra.mxu0 0
    %866 = vmatprep.subr.bf16.mxu0 0
    %867 = vmatpush1.bf16.msra.mxu0 0
    %868 = vmatprep.subr.bf16.mxu0 %v528
    %869 = vmatpush1.bf16.msra.mxu0 %v527
    %870 = vmatprep.subr.bf16.mxu0 %v526
    %871 = vmatpush1.bf16.msra.mxu0 %v525
    %872 = vmatprep.subr.bf16.mxu0 %v524
    %873 = vmatpush1.bf16.msra.mxu0 %v523
    %874 = vmatprep.subr.bf16.mxu0 %v522
    %875 = vmatpush1.bf16.msra.mxu0 %v521
    %876 = vmatprep.subr.bf16.mxu0 0
    %877 = vmatpush2.bf16.msra.mxu0 0
    %878 = vmatprep.subr.bf16.mxu0 0
    %879 = vmatpush2.bf16.msra.mxu0 0
    %880 = vmatprep.subr.bf16.mxu0 0
    %881 = vmatpush2.bf16.msra.mxu0 0
    %882 = vmatprep.subr.bf16.mxu0 0
    %883 = vmatpush2.bf16.msra.mxu0 0
    %884 = vmatprep.subr.bf16.mxu0 0
    %885 = vmatpush2.bf16.msra.mxu0 0
    %886 = vmatprep.subr.bf16.mxu0 0
    %887 = vmatpush2.bf16.msra.mxu0 0
    %888 = vmatprep.subr.bf16.mxu0 0
    %889 = vmatpush2.bf16.msra.mxu0 0
    %890 = vmatprep.subr.bf16.mxu0 0
    %891 = vmatpush2.bf16.msra.mxu0 0
    %892 = vmatprep.mubr.bf16.mxu0 0
    %893 = vmatmul.mubr.bf16.gmra.mxu0 %v858
    %v894 = vpop.f32.mrf.mxu0
    %v895 = vadd.f32 0.0, %v894
    %v896 = vpop.f32.mrf.mxu0
    %v897 = vadd.f32 0.0, %v896
    %v898 = vpop.f32.mrf.mxu0
    %v899 = vpop.f32.mrf.mxu0
    %900 = vdwg.mxu0
    %v901 = vadd.f32 %v489, %v895
    %v902 = vadd.f32 %v845, %v897
    %v903 = vxor.u32 %v901, 2147483648
    %v904 = vmul.f32 %v903, 1.442695
    %v905 = vpow.pop %v904
    %v906 = vadd.f32 %v905, 1.0
    %v907 = vrcp.pop %v906
    %v908 = vmul.f32 1.0, %v907
    %v909 = vtanh.pop %v901
    %v910 = vmul.f32 %v908, %v814
    %912 = vrot.lane.b32.xlu0 %v909, 64
    %v913 = vpop.permute.xlu0 %912
    %v915 = vmul.f32 %v908, %v913
    %917 = vrot.lane.b32.xlu0 %v915, 32
    %v918 = vpop.permute.xlu0 %917
    %v920 = vadd.f32 %v910, %v918
    %v921 = vtanh.pop %v920
    %923 = vrot.lane.b32.xlu0 %v921, 64
    %v924 = vpop.permute.xlu0 %923
    %v926 = vmul.f32 %v908, %v924
    %v927 = vxor.u32 %v902, 2147483648
    %v928 = vmul.f32 %v927, 1.442695
    %v929 = vpow.pop %v928
    %v930 = vadd.f32 %v929, 1.0
    %v931 = vrcp.pop %v930
    %v932 = vmul.f32 1.0, %v931
    %v933 = vtanh.pop %v902
    %v934 = vmul.f32 %v932, %v838
    %936 = vrot.lane.b32.xlu0 %v933, 64
    %v937 = vpop.permute.xlu0 %936
    %v939 = vmul.f32 %v932, %v937
    %941 = vrot.lane.b32.xlu0 %v939, 32
    %v942 = vpop.permute.xlu0 %941
    %v944 = vadd.f32 %v934, %v942
    %v945 = vtanh.pop %v944
    %947 = vrot.lane.b32.xlu0 %v945, 64
    %v948 = vpop.permute.xlu0 %947
    %v950 = vmul.f32 %v932, %v948
    %952 = vrot.lane.b32.xlu0 %v950, 64
    %v953 = vpop.permute.xlu0 %952
    %955 = vrot.lane.b32.xlu0 %v714, 96
    %v956 = vpop.permute.xlu0 %955
    %v958 = vsel %vm642, %v636, %v953
    %v959 = vsel %vm537, %v958, %v956
    %vm960 = vcmask 785408
    %v961 = vsel %vm960, %v959, %v844
    %963 = vrot.lane.b32.xlu0 %v926, 96
    %v964 = vpop.permute.xlu0 %963
    %v966 = vsel %vm642, %v849, %v747
    %v967 = vsel %vm537, %v966, %v964
    %v968 = vsel %vm960, %v967, %v631
    %v969 = vld [vmem:[#allocation9] sm:$0xff]
    %v970 = vld [vmem:[#allocation9 + $0x8] sm:$0xff]
    %v971 = vld [vmem:[#allocation9 + $0x10] sm:$0xff]
    %v972 = vld [vmem:[#allocation9 + $0x18] sm:$0xff]
    %v973 = vld [vmem:[#allocation9 + $0x20] sm:$0xff]
    %v974 = vld [vmem:[#allocation9 + $0x28] sm:$0xff]
    %v975 = vld [vmem:[#allocation9 + $0x30] sm:$0xff]
    %v976 = vld [vmem:[#allocation9 + $0x38] sm:$0xff]
    %v977 = vld [vmem:[#allocation9 + $0x40] sm:$0xff]
    %v978 = vld [vmem:[#allocation9 + $0x48] sm:$0xff]
    %v979 = vld [vmem:[#allocation9 + $0x50] sm:$0xff]
    %v980 = vld [vmem:[#allocation9 + $0x58] sm:$0xff]
    %v981 = vld [vmem:[#allocation9 + $0x60] sm:$0xff]
    %v982 = vld [vmem:[#allocation9 + $0x68] sm:$0xff]
    %v983 = vld [vmem:[#allocation9 + $0x70] sm:$0xff]
    %v984 = vld [vmem:[#allocation9 + $0x78] sm:$0xff]
    %v985 = vld [vmem:[#allocation10] sm:$0xff]
    %v986 = vld [vmem:[#allocation10 + $0x8] sm:$0xff]
    %v987 = vld [vmem:[#allocation10 + $0x10] sm:$0xff]
    %v988 = vld [vmem:[#allocation10 + $0x18] sm:$0xff]
    %v989 = vld [vmem:[#allocation10 + $0x20] sm:$0xff]
    %v990 = vld [vmem:[#allocation10 + $0x28] sm:$0xff]
    %v991 = vld [vmem:[#allocation10 + $0x30] sm:$0xff]
    %v992 = vld [vmem:[#allocation10 + $0x38] sm:$0xff]
    %v993 = vld [vmem:[#allocation12] sm:$0x3]
    %v996 = vcombine.low %v961, %v968
    %v998 = vunpack.c.l.s4 1983009808
    %v999 = vunpack.c.0.s8 %v998
    %v1000 = vlaneseq
    %v1001 = vshrl.u32 %v1000, 7
    %v1002 = vsub.s32 %v999, %v1001
    %v1003 = vrot.slane %v996, %v1002
    %v1005 = vpack.c.bf16 %v1003, %v1003
    %v1007 = vlaneseq
    %v1008 = vshrl.u32 %v1007, 7
    %v1009 = vsub.s32 0, %v1008
    %v1010 = vrot.slane %v993, %v1009
    %v1011 = vlaneseq
    %v1012 = vshrl.u32 %v1011, 7
    %v1013 = vsub.s32 1, %v1012
    %v1014 = vrot.slane %v993, %v1013
    %v1033 = vunpack.c.l.b16 %v969
    %v1034 = vunpack.c.h.b16 %v969
    %v1035 = vunpack.c.l.b16 %v970
    %v1036 = vunpack.c.h.b16 %v970
    %v1037 = vunpack.c.l.b16 %v971
    %v1038 = vunpack.c.h.b16 %v971
    %v1039 = vunpack.c.l.b16 %v972
    %v1040 = vunpack.c.h.b16 %v972
    %v1041 = vunpack.c.l.b16 %v973
    %v1042 = vunpack.c.h.b16 %v973
    %v1043 = vunpack.c.l.b16 %v974
    %v1044 = vunpack.c.h.b16 %v974
    %v1045 = vunpack.c.l.b16 %v975
    %v1046 = vunpack.c.h.b16 %v975
    %v1047 = vunpack.c.l.b16 %v976
    %v1048 = vunpack.c.h.b16 %v976
    %v1049 = vunpack.c.l.b16 %v977
    %v1050 = vunpack.c.h.b16 %v977
    %v1051 = vunpack.c.l.b16 %v978
    %v1052 = vunpack.c.h.b16 %v978
    %v1053 = vunpack.c.l.b16 %v979
    %v1054 = vunpack.c.h.b16 %v979
    %v1055 = vunpack.c.l.b16 %v980
    %v1056 = vunpack.c.h.b16 %v980
    %v1057 = vunpack.c.l.b16 %v981
    %v1058 = vunpack.c.h.b16 %v981
    %v1059 = vunpack.c.l.b16 %v982
    %v1060 = vunpack.c.h.b16 %v982
    %v1061 = vunpack.c.l.b16 %v983
    %v1062 = vunpack.c.h.b16 %v983
    %v1063 = vunpack.c.l.b16 %v984
    %v1064 = vunpack.c.h.b16 %v984
    %v1065 = vpack.c.b16 %v1035, %v1033
    %v1066 = vpack.c.b16 %v1036, %v1034
    %v1067 = vpack.c.b16 %v1039, %v1037
    %v1068 = vpack.c.b16 %v1040, %v1038
    %v1069 = vpack.c.b16 %v1043, %v1041
    %v1070 = vpack.c.b16 %v1044, %v1042
    %v1071 = vpack.c.b16 %v1047, %v1045
    %v1072 = vpack.c.b16 %v1048, %v1046
    %v1073 = vpack.c.b16 %v1051, %v1049
    %v1074 = vpack.c.b16 %v1052, %v1050
    %v1075 = vpack.c.b16 %v1055, %v1053
    %v1076 = vpack.c.b16 %v1056, %v1054
    %v1077 = vpack.c.b16 %v1059, %v1057
    %v1078 = vpack.c.b16 %v1060, %v1058
    %v1079 = vpack.c.b16 %v1063, %v1061
    %v1080 = vpack.c.b16 %v1064, %v1062
    %1097 = vmatprep.subr.bf16.mxu0 %v1080
    %1098 = vmatpush1.bf16.msra.mxu0 %v1079
    %1099 = vmatprep.subr.bf16.mxu0 %v1078
    %1100 = vmatpush1.bf16.msra.mxu0 %v1077
    %1101 = vmatprep.subr.bf16.mxu0 %v1076
    %1102 = vmatpush1.bf16.msra.mxu0 %v1075
    %1103 = vmatprep.subr.bf16.mxu0 %v1074
    %1104 = vmatpush1.bf16.msra.mxu0 %v1073
    %1105 = vmatprep.subr.bf16.mxu0 %v1072
    %1106 = vmatpush1.bf16.msra.mxu0 %v1071
    %1107 = vmatprep.subr.bf16.mxu0 %v1070
    %1108 = vmatpush1.bf16.msra.mxu0 %v1069
    %1109 = vmatprep.subr.bf16.mxu0 %v1068
    %1110 = vmatpush1.bf16.msra.mxu0 %v1067
    %1111 = vmatprep.subr.bf16.mxu0 %v1066
    %1112 = vmatpush1.bf16.msra.mxu0 %v1065
    %1113 = vmatprep.subr.bf16.mxu0 0
    %1114 = vmatpush2.bf16.msra.mxu0 0
    %1115 = vmatprep.subr.bf16.mxu0 0
    %1116 = vmatpush2.bf16.msra.mxu0 0
    %1117 = vmatprep.subr.bf16.mxu0 0
    %1118 = vmatpush2.bf16.msra.mxu0 0
    %1119 = vmatprep.subr.bf16.mxu0 0
    %1120 = vmatpush2.bf16.msra.mxu0 0
    %1121 = vmatprep.subr.bf16.mxu0 0
    %1122 = vmatpush2.bf16.msra.mxu0 0
    %1123 = vmatprep.subr.bf16.mxu0 0
    %1124 = vmatpush2.bf16.msra.mxu0 0
    %1125 = vmatprep.subr.bf16.mxu0 0
    %1126 = vmatpush2.bf16.msra.mxu0 0
    %1127 = vmatprep.subr.bf16.mxu0 0
    %1128 = vmatpush2.bf16.msra.mxu0 0
    %1129 = vmatprep.mubr.bf16.mxu0 0
    %1130 = vmatmul.mubr.bf16.gmra.mxu0 %v1005
    %v1131 = vpop.f32.mrf.mxu0
    %v1132 = vadd.f32 %v1010, %v1131
    %v1133 = vpop.f32.mrf.mxu0
    %v1134 = vadd.f32 %v1014, %v1133
    %v1135 = vpop.f32.mrf.mxu0
    %v1136 = vpop.f32.mrf.mxu0
    %1137 = vdwg.mxu0
    %v1140 = vcombine.low %v1132, %v1134
    %v1142 = vunpack.c.l.s4 1983009808
    %v1143 = vunpack.c.0.s8 %v1142
    %v1144 = vlaneseq
    %v1145 = vshrl.u32 %v1144, 7
    %v1146 = vsub.s32 %v1143, %v1145
    %v1147 = vrot.slane %v1140, %v1146
    %v1148 = vcombine.high %v1147, %v1147
    %v1151 = vrot.slane %v1148, 2
    %v1161 = vunpack.c.l.b16 %v985
    %v1162 = vunpack.c.h.b16 %v985
    %v1163 = vunpack.c.l.b16 %v986
    %v1164 = vunpack.c.h.b16 %v986
    %v1165 = vunpack.c.l.b16 %v987
    %v1166 = vunpack.c.h.b16 %v987
    %v1167 = vunpack.c.l.b16 %v988
    %v1168 = vunpack.c.h.b16 %v988
    %v1169 = vunpack.c.l.b16 %v989
    %v1170 = vunpack.c.h.b16 %v989
    %v1171 = vunpack.c.l.b16 %v990
    %v1172 = vunpack.c.h.b16 %v990
    %v1173 = vunpack.c.l.b16 %v991
    %v1174 = vunpack.c.h.b16 %v991
    %v1175 = vunpack.c.l.b16 %v992
    %v1176 = vunpack.c.h.b16 %v992
    %v1177 = vpack.c.b16 %v1163, %v1161
    %v1178 = vpack.c.b16 %v1164, %v1162
    %v1179 = vpack.c.b16 %v1167, %v1165
    %v1180 = vpack.c.b16 %v1168, %v1166
    %v1181 = vpack.c.b16 %v1171, %v1169
    %v1182 = vpack.c.b16 %v1172, %v1170
    %v1183 = vpack.c.b16 %v1175, %v1173
    %v1184 = vpack.c.b16 %v1176, %v1174
    %1193 = vmatprep.subr.bf16.mxu0 0
    %1194 = vmatpush1.bf16.msra.mxu0 0
    %1195 = vmatprep.subr.bf16.mxu0 0
    %1196 = vmatpush1.bf16.msra.mxu0 0
    %1197 = vmatprep.subr.bf16.mxu0 0
    %1198 = vmatpush1.bf16.msra.mxu0 0
    %1199 = vmatprep.subr.bf16.mxu0 0
    %1200 = vmatpush1.bf16.msra.mxu0 0
    %1201 = vmatprep.subr.bf16.mxu0 %v1184
    %1202 = vmatpush1.bf16.msra.mxu0 %v1183
    %1203 = vmatprep.subr.bf16.mxu0 %v1182
    %1204 = vmatpush1.bf16.msra.mxu0 %v1181
    %1205 = vmatprep.subr.bf16.mxu0 %v1180
    %1206 = vmatpush1.bf16.msra.mxu0 %v1179
    %1207 = vmatprep.subr.bf16.mxu0 %v1178
    %1208 = vmatpush1.bf16.msra.mxu0 %v1177
    %1209 = vmatprep.subr.bf16.mxu0 0
    %1210 = vmatpush2.bf16.msra.mxu0 0
    %1211 = vmatprep.subr.bf16.mxu0 0
    %1212 = vmatpush2.bf16.msra.mxu0 0
    %1213 = vmatprep.subr.bf16.mxu0 0
    %1214 = vmatpush2.bf16.msra.mxu0 0
    %1215 = vmatprep.subr.bf16.mxu0 0
    %1216 = vmatpush2.bf16.msra.mxu0 0
    %1217 = vmatprep.subr.bf16.mxu0 0
    %1218 = vmatpush2.bf16.msra.mxu0 0
    %1219 = vmatprep.subr.bf16.mxu0 0
    %1220 = vmatpush2.bf16.msra.mxu0 0
    %1221 = vmatprep.subr.bf16.mxu0 0
    %1222 = vmatpush2.bf16.msra.mxu0 0
    %1223 = vmatprep.subr.bf16.mxu0 0
    %1224 = vmatpush2.bf16.msra.mxu0 0
    %1225 = vmatprep.mubr.bf16.mxu0 0
    %1226 = vmatmul.mubr.bf16.gmra.mxu0 %v539
    %v1227 = vpop.f32.mrf.mxu0
    %v1228 = vadd.f32 0.0, %v1227
    %v1229 = vpop.f32.mrf.mxu0
    %v1230 = vadd.f32 0.0, %v1229
    %v1231 = vpop.f32.mrf.mxu0
    %v1232 = vpop.f32.mrf.mxu0
    %1233 = vdwg.mxu0
    %v1234 = vadd.f32 %v1147, %v1228
    %v1235 = vadd.f32 %v1151, %v1230
    %v1236 = vxor.u32 %v1234, 2147483648
    %v1237 = vmul.f32 %v1236, 1.442695
    %v1238 = vpow.pop %v1237
    %v1239 = vadd.f32 %v1238, 1.0
    %v1240 = vrcp.pop %v1239
    %v1241 = vmul.f32 1.0, %v1240
    %v1242 = vtanh.pop %v1234
    %v1243 = vmul.f32 %v1241, 0.0
    %1245 = vrot.lane.b32.xlu0 %v1242, 64
    %v1246 = vpop.permute.xlu0 %1245
    %v1248 = vmul.f32 %v1241, %v1246
    %1250 = vrot.lane.b32.xlu0 %v1248, 32
    %v1251 = vpop.permute.xlu0 %1250
    %v1253 = vadd.f32 %v1243, %v1251
    %v1254 = vtanh.pop %v1253
    %1256 = vrot.lane.b32.xlu0 %v1254, 64
    %v1257 = vpop.permute.xlu0 %1256
    %v1259 = vmul.f32 %v1241, %v1257
    %v1260 = vxor.u32 %v1235, 2147483648
    %v1261 = vmul.f32 %v1260, 1.442695
    %v1262 = vpow.pop %v1261
    %v1263 = vadd.f32 %v1262, 1.0
    %v1264 = vrcp.pop %v1263
    %v1265 = vmul.f32 1.0, %v1264
    %v1266 = vtanh.pop %v1235
    %v1267 = vmul.f32 %v1265, 0.0
    %1269 = vrot.lane.b32.xlu0 %v1266, 64
    %v1270 = vpop.permute.xlu0 %1269
    %v1272 = vmul.f32 %v1265, %v1270
    %1274 = vrot.lane.b32.xlu0 %v1272, 32
    %v1275 = vpop.permute.xlu0 %1274
    %v1277 = vadd.f32 %v1267, %v1275
    %v1278 = vtanh.pop %v1277
    %1280 = vrot.lane.b32.xlu0 %v1278, 64
    %v1281 = vpop.permute.xlu0 %1280
    %v1283 = vmul.f32 %v1265, %v1281
    %v1284 = vrot.slane %v1147, 2
    %1287 = vrot.lane.b32.xlu0 %v1259, 32
    %v1288 = vpop.permute.xlu0 %1287
    %1291 = vrot.lane.b32.xlu0 %v1283, 64
    %v1292 = vpop.permute.xlu0 %1291
    %v1294 = vsel %vm642, %v1288, %v1292
    %v1295 = vpack.c.bf16 %v1294, %v1294
    %v1297 = vsel %vm537, %v1295, 0
    %1299 = vmatprep.subr.bf16.mxu0 0
    %1300 = vmatpush1.bf16.msra.mxu0 0
    %1301 = vmatprep.subr.bf16.mxu0 0
    %1302 = vmatpush1.bf16.msra.mxu0 0
    %1303 = vmatprep.subr.bf16.mxu0 0
    %1304 = vmatpush1.bf16.msra.mxu0 0
    %1305 = vmatprep.subr.bf16.mxu0 0
    %1306 = vmatpush1.bf16.msra.mxu0 0
    %1307 = vmatprep.subr.bf16.mxu0 %v1184
    %1308 = vmatpush1.bf16.msra.mxu0 %v1183
    %1309 = vmatprep.subr.bf16.mxu0 %v1182
    %1310 = vmatpush1.bf16.msra.mxu0 %v1181
    %1311 = vmatprep.subr.bf16.mxu0 %v1180
    %1312 = vmatpush1.bf16.msra.mxu0 %v1179
    %1313 = vmatprep.subr.bf16.mxu0 %v1178
    %1314 = vmatpush1.bf16.msra.mxu0 %v1177
    %1315 = vmatprep.subr.bf16.mxu0 0
    %1316 = vmatpush2.bf16.msra.mxu0 0
    %1317 = vmatprep.subr.bf16.mxu0 0
    %1318 = vmatpush2.bf16.msra.mxu0 0
    %1319 = vmatprep.subr.bf16.mxu0 0
    %1320 = vmatpush2.bf16.msra.mxu0 0
    %1321 = vmatprep.subr.bf16.mxu0 0
    %1322 = vmatpush2.bf16.msra.mxu0 0
    %1323 = vmatprep.subr.bf16.mxu0 0
    %1324 = vmatpush2.bf16.msra.mxu0 0
    %1325 = vmatprep.subr.bf16.mxu0 0
    %1326 = vmatpush2.bf16.msra.mxu0 0
    %1327 = vmatprep.subr.bf16.mxu0 0
    %1328 = vmatpush2.bf16.msra.mxu0 0
    %1329 = vmatprep.subr.bf16.mxu0 0
    %1330 = vmatpush2.bf16.msra.mxu0 0
    %1331 = vmatprep.mubr.bf16.mxu0 0
    %1332 = vmatmul.mubr.bf16.gmra.mxu0 %v1297
    %v1333 = vpop.f32.mrf.mxu0
    %v1334 = vadd.f32 0.0, %v1333
    %v1335 = vpop.f32.mrf.mxu0
    %v1336 = vadd.f32 0.0, %v1335
    %v1337 = vpop.f32.mrf.mxu0
    %v1338 = vpop.f32.mrf.mxu0
    %1339 = vdwg.mxu0
    %v1340 = vadd.f32 %v1148, %v1334
    %v1341 = vadd.f32 %v1284, %v1336
    %v1342 = vxor.u32 %v1340, 2147483648
    %v1343 = vmul.f32 %v1342, 1.442695
    %v1344 = vpow.pop %v1343
    %v1345 = vadd.f32 %v1344, 1.0
    %v1346 = vrcp.pop %v1345
    %v1347 = vmul.f32 1.0, %v1346
    %v1348 = vtanh.pop %v1340
    %v1349 = vmul.f32 %v1347, %v1253
    %1351 = vrot.lane.b32.xlu0 %v1348, 64
    %v1352 = vpop.permute.xlu0 %1351
    %v1354 = vmul.f32 %v1347, %v1352
    %1356 = vrot.lane.b32.xlu0 %v1354, 32
    %v1357 = vpop.permute.xlu0 %1356
    %v1359 = vadd.f32 %v1349, %v1357
    %v1360 = vtanh.pop %v1359
    %1362 = vrot.lane.b32.xlu0 %v1360, 64
    %v1363 = vpop.permute.xlu0 %1362
    %v1365 = vmul.f32 %v1347, %v1363
    %v1366 = vxor.u32 %v1341, 2147483648
    %v1367 = vmul.f32 %v1366, 1.442695
    %v1368 = vpow.pop %v1367
    %v1369 = vadd.f32 %v1368, 1.0
    %v1370 = vrcp.pop %v1369
    %v1371 = vmul.f32 1.0, %v1370
    %v1372 = vtanh.pop %v1341
    %v1373 = vmul.f32 %v1371, %v1277
    %1375 = vrot.lane.b32.xlu0 %v1372, 64
    %v1376 = vpop.permute.xlu0 %1375
    %v1378 = vmul.f32 %v1371, %v1376
    %1380 = vrot.lane.b32.xlu0 %v1378, 32
    %v1381 = vpop.permute.xlu0 %1380
    %v1383 = vadd.f32 %v1373, %v1381
    %v1384 = vtanh.pop %v1383
    %1386 = vrot.lane.b32.xlu0 %v1384, 64
    %v1387 = vpop.permute.xlu0 %1386
    %v1389 = vmul.f32 %v1371, %v1387
    %1391 = vrot.lane.b32.xlu0 %v1389, 64
    %v1392 = vpop.permute.xlu0 %1391
    %1395 = vrot.lane.b32.xlu0 %v1365, 96
    %v1396 = vpop.permute.xlu0 %1395
    %v1398 = vsel %vm642, %v1288, %v1392
    %v1399 = vsel %vm537, %v1398, %v1396
    %v1400 = vsel %vm960, %v1399, %v1283
    %v1401 = vld [vmem:[%s9] sm:$0xff]
    %v1402 = vld [vmem:[%s9 + $0x8] sm:$0xff]
    %v1403 = vld [vmem:[%s9 + $0x10] sm:$0xff]
    %v1404 = vld [vmem:[%s9 + $0x18] sm:$0xff]
    %v1405 = vld [vmem:[%s9 + $0x20] sm:$0xff]
    %v1406 = vld [vmem:[%s9 + $0x28] sm:$0xff]
    %v1407 = vld [vmem:[%s9 + $0x30] sm:$0xff]
    %v1408 = vld [vmem:[%s9 + $0x38] sm:$0xff]
    %v1409 = vld [vmem:[%s9 + $0x40] sm:$0xff]
    %v1410 = vld [vmem:[%s9 + $0x48] sm:$0xff]
    %v1411 = vld [vmem:[%s9 + $0x50] sm:$0xff]
    %v1412 = vld [vmem:[%s9 + $0x58] sm:$0xff]
    %v1413 = vld [vmem:[%s9 + $0x60] sm:$0xff]
    %v1414 = vld [vmem:[%s9 + $0x68] sm:$0xff]
    %v1415 = vld [vmem:[%s9 + $0x70] sm:$0xff]
    %v1416 = vld [vmem:[%s9 + $0x78] sm:$0xff]
    %v1417 = vld [vmem:[#allocation13] sm:$0xff]
    %v1418 = vld [vmem:[#allocation13 + $0x8] sm:$0xff]
    %v1419 = vld [vmem:[#allocation13 + $0x10] sm:$0xff]
    %v1420 = vld [vmem:[#allocation13 + $0x18] sm:$0xff]
    %v1421 = vld [vmem:[#allocation13 + $0x20] sm:$0xff]
    %v1422 = vld [vmem:[#allocation13 + $0x28] sm:$0xff]
    %v1423 = vld [vmem:[#allocation13 + $0x30] sm:$0xff]
    %v1424 = vld [vmem:[#allocation13 + $0x38] sm:$0xff]
    %v1425 = vld [vmem:[#allocation15] sm:$0x3]
    %v1426 = vpack.c.bf16 %v1400, %v1400
    %v1428 = vlaneseq
    %v1429 = vshrl.u32 %v1428, 7
    %v1430 = vsub.s32 0, %v1429
    %v1431 = vrot.slane %v1425, %v1430
    %v1432 = vlaneseq
    %v1433 = vshrl.u32 %v1432, 7
    %v1434 = vsub.s32 1, %v1433
    %v1435 = vrot.slane %v1425, %v1434
    %v1454 = vunpack.c.l.b16 %v1401
    %v1455 = vunpack.c.h.b16 %v1401
    %v1456 = vunpack.c.l.b16 %v1402
    %v1457 = vunpack.c.h.b16 %v1402
    %v1458 = vunpack.c.l.b16 %v1403
    %v1459 = vunpack.c.h.b16 %v1403
    %v1460 = vunpack.c.l.b16 %v1404
    %v1461 = vunpack.c.h.b16 %v1404
    %v1462 = vunpack.c.l.b16 %v1405
    %v1463 = vunpack.c.h.b16 %v1405
    %v1464 = vunpack.c.l.b16 %v1406
    %v1465 = vunpack.c.h.b16 %v1406
    %v1466 = vunpack.c.l.b16 %v1407
    %v1467 = vunpack.c.h.b16 %v1407
    %v1468 = vunpack.c.l.b16 %v1408
    %v1469 = vunpack.c.h.b16 %v1408
    %v1470 = vunpack.c.l.b16 %v1409
    %v1471 = vunpack.c.h.b16 %v1409
    %v1472 = vunpack.c.l.b16 %v1410
    %v1473 = vunpack.c.h.b16 %v1410
    %v1474 = vunpack.c.l.b16 %v1411
    %v1475 = vunpack.c.h.b16 %v1411
    %v1476 = vunpack.c.l.b16 %v1412
    %v1477 = vunpack.c.h.b16 %v1412
    %v1478 = vunpack.c.l.b16 %v1413
    %v1479 = vunpack.c.h.b16 %v1413
    %v1480 = vunpack.c.l.b16 %v1414
    %v1481 = vunpack.c.h.b16 %v1414
    %v1482 = vunpack.c.l.b16 %v1415
    %v1483 = vunpack.c.h.b16 %v1415
    %v1484 = vunpack.c.l.b16 %v1416
    %v1485 = vunpack.c.h.b16 %v1416
    %v1486 = vpack.c.b16 %v1456, %v1454
    %v1487 = vpack.c.b16 %v1457, %v1455
    %v1488 = vpack.c.b16 %v1460, %v1458
    %v1489 = vpack.c.b16 %v1461, %v1459
    %v1490 = vpack.c.b16 %v1464, %v1462
    %v1491 = vpack.c.b16 %v1465, %v1463
    %v1492 = vpack.c.b16 %v1468, %v1466
    %v1493 = vpack.c.b16 %v1469, %v1467
    %v1494 = vpack.c.b16 %v1472, %v1470
    %v1495 = vpack.c.b16 %v1473, %v1471
    %v1496 = vpack.c.b16 %v1476, %v1474
    %v1497 = vpack.c.b16 %v1477, %v1475
    %v1498 = vpack.c.b16 %v1480, %v1478
    %v1499 = vpack.c.b16 %v1481, %v1479
    %v1500 = vpack.c.b16 %v1484, %v1482
    %v1501 = vpack.c.b16 %v1485, %v1483
    %1518 = vmatprep.subr.bf16.mxu0 %v1501
    %1519 = vmatpush1.bf16.msra.mxu0 %v1500
    %1520 = vmatprep.subr.bf16.mxu0 %v1499
    %1521 = vmatpush1.bf16.msra.mxu0 %v1498
    %1522 = vmatprep.subr.bf16.mxu0 %v1497
    %1523 = vmatpush1.bf16.msra.mxu0 %v1496
    %1524 = vmatprep.subr.bf16.mxu0 %v1495
    %1525 = vmatpush1.bf16.msra.mxu0 %v1494
    %1526 = vmatprep.subr.bf16.mxu0 %v1493
    %1527 = vmatpush1.bf16.msra.mxu0 %v1492
    %1528 = vmatprep.subr.bf16.mxu0 %v1491
    %1529 = vmatpush1.bf16.msra.mxu0 %v1490
    %1530 = vmatprep.subr.bf16.mxu0 %v1489
    %1531 = vmatpush1.bf16.msra.mxu0 %v1488
    %1532 = vmatprep.subr.bf16.mxu0 %v1487
    %1533 = vmatpush1.bf16.msra.mxu0 %v1486
    %1534 = vmatprep.subr.bf16.mxu0 0
    %1535 = vmatpush2.bf16.msra.mxu0 0
    %1536 = vmatprep.subr.bf16.mxu0 0
    %1537 = vmatpush2.bf16.msra.mxu0 0
    %1538 = vmatprep.subr.bf16.mxu0 0
    %1539 = vmatpush2.bf16.msra.mxu0 0
    %1540 = vmatprep.subr.bf16.mxu0 0
    %1541 = vmatpush2.bf16.msra.mxu0 0
    %1542 = vmatprep.subr.bf16.mxu0 0
    %1543 = vmatpush2.bf16.msra.mxu0 0
    %1544 = vmatprep.subr.bf16.mxu0 0
    %1545 = vmatpush2.bf16.msra.mxu0 0
    %1546 = vmatprep.subr.bf16.mxu0 0
    %1547 = vmatpush2.bf16.msra.mxu0 0
    %1548 = vmatprep.subr.bf16.mxu0 0
    %1549 = vmatpush2.bf16.msra.mxu0 0
    %1550 = vmatprep.mubr.bf16.mxu0 0
    %1551 = vmatmul.mubr.bf16.gmra.mxu0 %v1426
    %v1552 = vpop.f32.mrf.mxu0
    %v1553 = vadd.f32 %v1431, %v1552
    %v1554 = vpop.f32.mrf.mxu0
    %v1555 = vadd.f32 %v1435, %v1554
    %v1556 = vpop.f32.mrf.mxu0
    %v1557 = vpop.f32.mrf.mxu0
    %1558 = vdwg.mxu0
    %v1567 = vunpack.c.l.b16 %v1417
    %v1568 = vunpack.c.h.b16 %v1417
    %v1569 = vunpack.c.l.b16 %v1418
    %v1570 = vunpack.c.h.b16 %v1418
    %v1571 = vunpack.c.l.b16 %v1419
    %v1572 = vunpack.c.h.b16 %v1419
    %v1573 = vunpack.c.l.b16 %v1420
    %v1574 = vunpack.c.h.b16 %v1420
    %v1575 = vunpack.c.l.b16 %v1421
    %v1576 = vunpack.c.h.b16 %v1421
    %v1577 = vunpack.c.l.b16 %v1422
    %v1578 = vunpack.c.h.b16 %v1422
    %v1579 = vunpack.c.l.b16 %v1423
    %v1580 = vunpack.c.h.b16 %v1423
    %v1581 = vunpack.c.l.b16 %v1424
    %v1582 = vunpack.c.h.b16 %v1424
    %v1583 = vpack.c.b16 %v1569, %v1567
    %v1584 = vpack.c.b16 %v1570, %v1568
    %v1585 = vpack.c.b16 %v1573, %v1571
    %v1586 = vpack.c.b16 %v1574, %v1572
    %v1587 = vpack.c.b16 %v1577, %v1575
    %v1588 = vpack.c.b16 %v1578, %v1576
    %v1589 = vpack.c.b16 %v1581, %v1579
    %v1590 = vpack.c.b16 %v1582, %v1580
    %1599 = vmatprep.subr.bf16.mxu0 0
    %1600 = vmatpush1.bf16.msra.mxu0 0
    %1601 = vmatprep.subr.bf16.mxu0 0
    %1602 = vmatpush1.bf16.msra.mxu0 0
    %1603 = vmatprep.subr.bf16.mxu0 0
    %1604 = vmatpush1.bf16.msra.mxu0 0
    %1605 = vmatprep.subr.bf16.mxu0 0
    %1606 = vmatpush1.bf16.msra.mxu0 0
    %1607 = vmatprep.subr.bf16.mxu0 %v1590
    %1608 = vmatpush1.bf16.msra.mxu0 %v1589
    %1609 = vmatprep.subr.bf16.mxu0 %v1588
    %1610 = vmatpush1.bf16.msra.mxu0 %v1587
    %1611 = vmatprep.subr.bf16.mxu0 %v1586
    %1612 = vmatpush1.bf16.msra.mxu0 %v1585
    %1613 = vmatprep.subr.bf16.mxu0 %v1584
    %1614 = vmatpush1.bf16.msra.mxu0 %v1583
    %1615 = vmatprep.subr.bf16.mxu0 0
    %1616 = vmatpush2.bf16.msra.mxu0 0
    %1617 = vmatprep.subr.bf16.mxu0 0
    %1618 = vmatpush2.bf16.msra.mxu0 0
    %1619 = vmatprep.subr.bf16.mxu0 0
    %1620 = vmatpush2.bf16.msra.mxu0 0
    %1621 = vmatprep.subr.bf16.mxu0 0
    %1622 = vmatpush2.bf16.msra.mxu0 0
    %1623 = vmatprep.subr.bf16.mxu0 0
    %1624 = vmatpush2.bf16.msra.mxu0 0
    %1625 = vmatprep.subr.bf16.mxu0 0
    %1626 = vmatpush2.bf16.msra.mxu0 0
    %1627 = vmatprep.subr.bf16.mxu0 0
    %1628 = vmatpush2.bf16.msra.mxu0 0
    %1629 = vmatprep.subr.bf16.mxu0 0
    %1630 = vmatpush2.bf16.msra.mxu0 0
    %1631 = vmatprep.mubr.bf16.mxu0 0
    %1632 = vmatmul.mubr.bf16.gmra.mxu0 %v539
    %v1633 = vpop.f32.mrf.mxu0
    %v1634 = vadd.f32 0.0, %v1633
    %v1635 = vpop.f32.mrf.mxu0
    %v1636 = vadd.f32 0.0, %v1635
    %v1637 = vpop.f32.mrf.mxu0
    %v1638 = vpop.f32.mrf.mxu0
    %1639 = vdwg.mxu0
    %v1640 = vadd.f32 %v1553, %v1634
    %v1641 = vadd.f32 %v1555, %v1636
    %v1642 = vxor.u32 %v1640, 2147483648
    %v1643 = vmul.f32 %v1642, 1.442695
    %v1644 = vpow.pop %v1643
    %v1645 = vadd.f32 %v1644, 1.0
    %v1646 = vrcp.pop %v1645
    %v1647 = vmul.f32 1.0, %v1646
    %v1648 = vtanh.pop %v1640
    %v1649 = vmul.f32 %v1647, 0.0
    %1651 = vrot.lane.b32.xlu0 %v1648, 64
    %v1652 = vpop.permute.xlu0 %1651
    %v1654 = vmul.f32 %v1647, %v1652
    %1656 = vrot.lane.b32.xlu0 %v1654, 32
    %v1657 = vpop.permute.xlu0 %1656
    %v1659 = vadd.f32 %v1649, %v1657
    %v1660 = vtanh.pop %v1659
    %1662 = vrot.lane.b32.xlu0 %v1660, 64
    %v1663 = vpop.permute.xlu0 %1662
    %v1665 = vmul.f32 %v1647, %v1663
    %v1666 = vxor.u32 %v1641, 2147483648
    %v1667 = vmul.f32 %v1666, 1.442695
    %v1668 = vpow.pop %v1667
    %v1669 = vadd.f32 %v1668, 1.0
    %v1670 = vrcp.pop %v1669
    %v1671 = vmul.f32 1.0, %v1670
    %v1672 = vtanh.pop %v1641
    %v1673 = vmul.f32 %v1671, 0.0
    %1675 = vrot.lane.b32.xlu0 %v1672, 64
    %v1676 = vpop.permute.xlu0 %1675
    %v1678 = vmul.f32 %v1671, %v1676
    %1680 = vrot.lane.b32.xlu0 %v1678, 32
    %v1681 = vpop.permute.xlu0 %1680
    %v1683 = vadd.f32 %v1673, %v1681
    %v1684 = vtanh.pop %v1683
    %1686 = vrot.lane.b32.xlu0 %v1684, 64
    %v1687 = vpop.permute.xlu0 %1686
    %v1689 = vmul.f32 %v1671, %v1687
    %1691 = vrot.lane.b32.xlu0 %v1665, 32
    %v1692 = vpop.permute.xlu0 %1691
    %1695 = vrot.lane.b32.xlu0 %v1689, 64
    %v1696 = vpop.permute.xlu0 %1695
    %v1698 = vsel %vm642, %v1692, %v1696
    %v1699 = vpack.c.bf16 %v1698, %v1698
    %v1700 = vld [vmem:[%s12] sm:$0xf]
    %v1701 = vld [vmem:[%s12 + $0x4] sm:$0xf]
    %v1702 = vld [vmem:[%s12 + $0x8] sm:$0xf]
    %v1703 = vld [vmem:[%s12 + $0xc] sm:$0xf]
    %v1704 = vld [vmem:[%s12 + $0x10] sm:$0xf]
    %v1705 = vld [vmem:[%s12 + $0x14] sm:$0xf]
    %v1706 = vld [vmem:[%s12 + $0x18] sm:$0xf]
    %v1707 = vld [vmem:[%s12 + $0x1c] sm:$0xf]
    %v1708 = vld [vmem:[%s13] sm:$0x1]
    %v1710 = vlaneseq
    %v1711 = vshrl.u32 %v1710, 7
    %v1712 = vsub.s32 0, %v1711
    %v1713 = vrot.slane %v1708, %v1712
    %v1723 = vunpack.c.l.b16 %v1700
    %v1724 = vunpack.c.l.b16 %v1701
    %v1725 = vunpack.c.l.b16 %v1702
    %v1726 = vunpack.c.l.b16 %v1703
    %v1727 = vunpack.c.l.b16 %v1704
    %v1728 = vunpack.c.l.b16 %v1705
    %v1729 = vunpack.c.l.b16 %v1706
    %v1730 = vunpack.c.l.b16 %v1707
    %v1731 = vpack.c.b16 %v1724, %v1723
    %v1732 = vpack.c.b16 %v1726, %v1725
    %v1733 = vpack.c.b16 %v1728, %v1727
    %v1734 = vpack.c.b16 %v1730, %v1729
    %v1740 = vsel %vm537, %v1699, 0
    %1742 = vmatprep.subr.bf16.mxu0 0
    %1743 = vmatpush1.bf16.msra.mxu0 0
    %1744 = vmatprep.subr.bf16.mxu0 0
    %1745 = vmatpush1.bf16.msra.mxu0 0
    %1746 = vmatprep.subr.bf16.mxu0 0
    %1747 = vmatpush1.bf16.msra.mxu0 0
    %1748 = vmatprep.subr.bf16.mxu0 0
    %1749 = vmatpush1.bf16.msra.mxu0 0
    %1750 = vmatprep.subr.bf16.mxu0 0
    %1751 = vmatpush1.bf16.msra.mxu0 %v1734
    %1752 = vmatprep.subr.bf16.mxu0 0
    %1753 = vmatpush1.bf16.msra.mxu0 %v1733
    %1754 = vmatprep.subr.bf16.mxu0 0
    %1755 = vmatpush1.bf16.msra.mxu0 %v1732
    %1756 = vmatprep.subr.bf16.mxu0 0
    %1757 = vmatpush1.bf16.msra.mxu0 %v1731
    %1758 = vmatprep.subr.bf16.mxu0 0
    %1759 = vmatpush2.bf16.msra.mxu0 0
    %1760 = vmatprep.subr.bf16.mxu0 0
    %1761 = vmatpush2.bf16.msra.mxu0 0
    %1762 = vmatprep.subr.bf16.mxu0 0
    %1763 = vmatpush2.bf16.msra.mxu0 0
    %1764 = vmatprep.subr.bf16.mxu0 0
    %1765 = vmatpush2.bf16.msra.mxu0 0
    %1766 = vmatprep.subr.bf16.mxu0 0
    %1767 = vmatpush2.bf16.msra.mxu0 0
    %1768 = vmatprep.subr.bf16.mxu0 0
    %1769 = vmatpush2.bf16.msra.mxu0 0
    %1770 = vmatprep.subr.bf16.mxu0 0
    %1771 = vmatpush2.bf16.msra.mxu0 0
    %1772 = vmatprep.subr.bf16.mxu0 0
    %1773 = vmatpush2.bf16.msra.mxu0 0
    %1774 = vmatprep.mubr.bf16.mxu0 0
    %1775 = vmatmul.mubr.bf16.gmra.mxu0 %v1740
    %v1776 = vpop.f32.mrf.mxu0
    %v1777 = vadd.f32 %v1713, %v1776
    %v1778 = vpop.f32.mrf.mxu0
    %v1779 = vpop.f32.mrf.mxu0
    %v1780 = vpop.f32.mrf.mxu0
    %1781 = vdwg.mxu0
    %vm1782 = vcmask 58368
    %1783 = vst.msk [vmem:[#allocation16] sm:$0x3] %vm1782, %v1777
    %1785 = vrot.lane.b32.xlu0 %v1777, 120
    %v1786 = vpop.permute.xlu0 %1785
    %1788 = vst.msk [vmem:[#allocation17] sm:$0x3] %vm1782, %v1786
    // Predicated region
    $region90: #{encoder_forward.1} parent=1 // pred_check
      _
    $region91: #{encoder_forward.1} parent=1 // pred_check_branch
      %1790 = sbr.rel (0) target = $region93
    $region92: #{encoder_forward.1} parent=1 // pred_region
      %s1792 = ssub.s32 32, 32
      %1793 = vsyncadd [#allocation4], %s1792
      %s1795 = sshll.u32 [#allocation16], 4
      %s1796 = int_to_ptr.vmem [resolvable:$true] %s1795
      %1798 = dma.vmem_to_hbm [thread:$0]  %s1796, 32, %s14, [#allocation4]
    $region93: #{encoder_forward.1} parent=1 // pred_fallthru
      _
    // Predicated region
    $region94: #{encoder_forward.1} parent=1 // pred_check
      _
    $region95: #{encoder_forward.1} parent=1 // pred_check_branch
      %1800 = sbr.rel (0) target = $region97
    $region96: #{encoder_forward.1} parent=1 // pred_region
      %s1802 = ssub.s32 32, 32
      %1803 = vsyncadd [#allocation18], %s1802
      %s1805 = sshll.u32 [#allocation17], 4
      %s1806 = int_to_ptr.vmem [resolvable:$true] %s1805
      %1808 = dma.vmem_to_hbm [thread:$0]  %s1806, 32, %s15, [#allocation18]
    $region97: #{encoder_forward.1} parent=1 // pred_fallthru
      _
    // Predicated region
    $region98: #{encoder_forward.1} parent=1 // pred_check
      _
    $region99: #{encoder_forward.1} parent=1 // pred_check_branch
      %1810 = sbr.rel (0) target = $region101
    $region100: #{encoder_forward.1} parent=1 // pred_region
      %1811 = dma.done [#allocation4], 32
    $region101: #{encoder_forward.1} parent=1 // pred_fallthru
      _
    // Predicated region
    $region102: #{encoder_forward.1} parent=1 // pred_check
      _
    $region103: #{encoder_forward.1} parent=1 // pred_check_branch
      %1813 = sbr.rel (0) target = $region105
    $region104: #{encoder_forward.1} parent=1 // pred_region
      %1814 = dma.done [#allocation18], 32
    $region105: #{encoder_forward.1} parent=1 // pred_fallthru
      _
    %1815 = vsyncpa [#allocation3], 1
    %1816 = vsyncpa [#allocation8], 1
    %1817 = vsyncpa [#allocation11], 1
    %1818 = vsyncpa [#allocation14], 1
    %1819 = vsyncpa [#allocation4], 1
    %1820 = vsyncpa [#allocation18], 1
    %1821 = vsyncpa [#allocation5], 1

</llo_original>
